<compile_context>
chip_gen: v7x
topology: tpu7x:2x2x1
jax: 0.10.0
libtpu: 0.0.40
codegen_flags: <defaults>
</compile_context>

<pallas_src>
import jax
import jax.numpy as jnp
from jax.experimental import pallas as pl
from jax.experimental.pallas import tpu as pltpu


# ---------------------------------------------------------------------------
# Kernels
# ---------------------------------------------------------------------------
def _jumprelu_body(x_ref, w_enc_ref, bt_ref, w_dec_ref):
    """encode + JumpReLU + partial decode for one (row-tile, d_sae-tile)."""
    pre = jnp.dot(x_ref[...], w_enc_ref[...],
                  preferred_element_type=jnp.float32)          # [tm, ts] f32
    bt = bt_ref[...]                                           # [2, ts] f32
    pre = pre + bt[0:1, :]                                     # + b_enc
    # JumpReLU: mask * relu(pre) — exact semantics of the reference module,
    # valid even for negative thresholds.
    acts = jnp.where(pre > bt[1:2, :], jnp.maximum(pre, 0.0), 0.0)
    return jnp.dot(acts.astype(w_dec_ref.dtype), w_dec_ref[...],
                   preferred_element_type=jnp.float32)         # [tm, d_model]


def _kernel_f32_out(x_ref, w_enc_ref, bt_ref, w_dec_ref, b_dec_ref, out_ref):
    """f32 output: accumulate directly into the resident output block."""
    j = pl.program_id(1)

    @pl.when(j == 0)
    def _():
        out_ref[...] = jnp.broadcast_to(b_dec_ref[...], out_ref.shape)

    out_ref[...] += _jumprelu_body(x_ref, w_enc_ref, bt_ref, w_dec_ref)


def _kernel_acc_scratch(x_ref, w_enc_ref, bt_ref, w_dec_ref, b_dec_ref,
                        out_ref, acc_ref):
    """Non-f32 output: f32 scratch accumulator, cast once at the end."""
    j = pl.program_id(1)

    @pl.when(j == 0)
    def _():
        acc_ref[...] = jnp.broadcast_to(b_dec_ref[...], acc_ref.shape)

    acc_ref[...] += _jumprelu_body(x_ref, w_enc_ref, bt_ref, w_dec_ref)

    @pl.when(j == pl.num_programs(1) - 1)
    def _():
        out_ref[...] = acc_ref[...].astype(out_ref.dtype)


# ---------------------------------------------------------------------------
# Tiling / VMEM heuristics
# ---------------------------------------------------------------------------
def _pick_tile(total, candidates, fallback):
    for c in candidates:
        if c <= total and total % c == 0:
            return c
    return fallback


def _auto_tiles(N, d_sae, tm, ts):
    if tm is None:
        if N <= 512:
            # Single pass over both weight matrices: minimum HBM traffic.
            tm = N
        else:
            # Multiple row steps: the 'parallel' axis can shard across v7x's
            # two TensorCores; partial final M-blocks are handled by Pallas.
            tm = _pick_tile(N, (512, 256, 128, 64, 32, 16, 8), 512)
    if ts is None:
        # 512/256/128 are multiples of both the 128-wide (v5e) and 256-wide
        # (v6e/v7x) MXU; must divide d_sae exactly (reduction axis).
        ts = _pick_tile(d_sae, (512, 256, 128), d_sae)
    assert d_sae % ts == 0, "d_sae tile must divide d_sae (reduction axis)"
    return tm, ts


def _vmem_limit_bytes(tm, ts, d_model, in_itemsize, out_itemsize, use_scratch):
    est = (2 * tm * d_model * in_itemsize      # x (double-buffered)
           + 2 * d_model * ts * in_itemsize    # W_enc tile
           + 2 * ts * d_model * in_itemsize    # W_dec tile
           + 2 * 2 * ts * 4                    # packed (b_enc, threshold)
           + 2 * d_model * 4                   # b_dec
           + 2 * tm * d_model * out_itemsize   # output tile
           + (tm * d_model * 4 if use_scratch else 0)   # f32 accumulator
           + 2 * tm * ts * 4)                  # pre / acts live values
    try:
        phys = pltpu.get_tpu_info().vmem_capacity_bytes
    except Exception:
        phys = 64 * 1024 * 1024                # conservative (v7x) fallback
    return int(min(max(2 * est, 32 * 1024 * 1024), int(phys * 0.9)))


# ---------------------------------------------------------------------------
# Wrapper
# ---------------------------------------------------------------------------
def jumprelu_sae_forward(x, w_enc, w_dec, threshold, b_enc, b_dec,
                         *, tm=None, ts=None):
    # Flatten any leading dims to a single row axis [N, d_model].
    orig_shape = x.shape
    d_model_in = orig_shape[-1]
    x2 = x.reshape(-1, d_model_in)

    N, d_model = x2.shape
    d_sae = w_enc.shape[1]
    assert w_enc.shape == (d_model, d_sae)
    assert w_dec.shape == (d_sae, d_model)
    # Lane-dense output tiles (unmasked stores) + clean MXU tiling.
    assert d_model % 128 == 0, "d_model must be a multiple of 128"

    tm, ts = _auto_tiles(N, d_sae, tm, ts)

    # Pack b_enc + threshold into one (2, d_sae) f32 operand; biases stay f32.
    bt = jnp.stack([b_enc.astype(jnp.float32),
                    threshold.astype(jnp.float32)], axis=0)
    b_dec2 = b_dec.astype(jnp.float32).reshape(1, d_model)

    out_dtype = x.dtype
    direct_out = (jnp.dtype(out_dtype) == jnp.dtype(jnp.float32))
    kernel = _kernel_f32_out if direct_out else _kernel_acc_scratch
    scratch = [] if direct_out else [pltpu.VMEM((tm, d_model), jnp.float32)]

    grid = (pl.cdiv(N, tm), d_sae // ts)
    vmem_limit = _vmem_limit_bytes(
        tm, ts, d_model, jnp.dtype(x.dtype).itemsize,
        jnp.dtype(out_dtype).itemsize, not direct_out)

    in_bytes = jnp.dtype(x.dtype).itemsize
    cost = pl.CostEstimate(
        flops=2 * N * d_sae * (2 * d_model),        # encode + decode matmuls
        transcendentals=0,
        bytes_accessed=(N * d_model * in_bytes                       # x
                        + 2 * d_model * d_sae * in_bytes             # weights
                        + N * d_model * jnp.dtype(out_dtype).itemsize))

    out = pl.pallas_call(
        kernel,
        out_shape=jax.ShapeDtypeStruct((N, d_model), out_dtype),
        grid_spec=pltpu.PrefetchScalarGridSpec(
            num_scalar_prefetch=0,
            grid=grid,
            in_specs=[
                pl.BlockSpec((tm, d_model), lambda i, j: (i, 0)),   # x
                pl.BlockSpec((d_model, ts), lambda i, j: (0, j)),   # W_enc
                pl.BlockSpec((2, ts),       lambda i, j: (0, j)),   # b_enc+thr
                pl.BlockSpec((ts, d_model), lambda i, j: (j, 0)),   # W_dec
                pl.BlockSpec((1, d_model),  lambda i, j: (0, 0)),   # b_dec
            ],
            out_specs=pl.BlockSpec((tm, d_model), lambda i, j: (i, 0)),
            scratch_shapes=scratch,
        ),
        compiler_params=pltpu.CompilerParams(
            dimension_semantics=("parallel", "arbitrary"),
            vmem_limit_bytes=vmem_limit),
        cost_estimate=cost,
    )(x2, w_enc, bt, w_dec, b_dec2)

    return out.reshape(orig_shape[:-1] + (d_model,))


# ---------------------------------------------------------------------------
# Pure-JAX reference (mirrors the kernel's compute path)
# ---------------------------------------------------------------------------
def jumprelu_sae_reference(x, w_enc, w_dec, threshold, b_enc, b_dec):
    pre = jnp.dot(x, w_enc, preferred_element_type=jnp.float32)
    pre = pre + b_enc.astype(jnp.float32)
    acts = jnp.where(pre > threshold.astype(jnp.float32),
                     jnp.maximum(pre, 0.0), 0.0)
    recon = jnp.dot(acts.astype(w_dec.dtype), w_dec,
                    preferred_element_type=jnp.float32)
    recon = recon + b_dec.astype(jnp.float32)
    return recon.astype(x.dtype)


# TODO(synk): from_pretrained (HF checkpoint download / state_dict load) is
# host-side I/O and intentionally not part of the kernel.

if __name__ == "__main__":
    key = jax.random.PRNGKey(0)
    N, d_model, d_sae = 64, 256, 1024   # small shapes; grid = (1, 2)

    k0, k1, k2, k3, k4, k5 = jax.random.split(key, 6)
    x = jax.random.normal(k0, (N, d_model), dtype=jnp.float32)
    W_enc = jax.random.normal(k1, (d_model, d_sae), dtype=jnp.float32) * 0.05
    W_dec = jax.random.normal(k2, (d_sae, d_model), dtype=jnp.float32) * 0.05
    threshold = jax.random.uniform(k3, (d_sae,), dtype=jnp.float32) * 0.1
    b_enc = jax.random.normal(k4, (d_sae,), dtype=jnp.float32) * 0.01
    b_dec = jax.random.normal(k5, (d_model,), dtype=jnp.float32) * 0.01

    # --- f32 path (exact semantics of the PyTorch module) ---
    out = jumprelu_sae_forward(x, W_enc, W_dec, threshold, b_enc, b_dec)
    out = jax.block_until_ready(out)
    ref = jumprelu_sae_reference(x, W_enc, W_dec, threshold, b_enc, b_dec)
    assert out.shape == (N, d_model)
    assert jnp.allclose(out, ref, atol=1e-4, rtol=1e-4), "f32 mismatch vs reference"

    # --- bf16 path (halves HBM weight traffic; f32 MXU accumulation) ---
    x_bf = x.astype(jnp.bfloat16)
    We_bf = W_enc.astype(jnp.bfloat16)
    Wd_bf = W_dec.astype(jnp.bfloat16)
    out_bf = jumprelu_sae_forward(x_bf, We_bf, Wd_bf, threshold, b_enc, b_dec)
    out_bf = jax.block_until_ready(out_bf)
    ref_bf = jumprelu_sae_reference(x_bf, We_bf, Wd_bf, threshold, b_enc, b_dec)
    assert out_bf.dtype == jnp.bfloat16
    assert jnp.allclose(out_bf.astype(jnp.float32), ref_bf.astype(jnp.float32),
                        atol=5e-2, rtol=5e-2), "bf16 mismatch vs reference"

    # --- 3-D input (leading dims flattened inside the wrapper) ---
    x3 = x.reshape(4, 16, d_model)
    out3 = jax.block_until_ready(
        jumprelu_sae_forward(x3, W_enc, W_dec, threshold, b_enc, b_dec))
    assert out3.shape == (4, 16, d_model)
    assert jnp.allclose(out3.reshape(N, d_model), ref, atol=1e-4, rtol=1e-4)

    print("KERNEL_OK")
</pallas_src>

<mosaic_0001>
module attributes {stable_mosaic.version = 11 : i64} {
  func.func @_kernel_f32_out(%arg0: i32, %arg1: i32, %arg2: memref<64x256xf32, #tpu.memory_space<vmem>>, %arg3: memref<256x512xf32, #tpu.memory_space<vmem>>, %arg4: memref<2x512xf32, #tpu.memory_space<vmem>>, %arg5: memref<512x256xf32, #tpu.memory_space<vmem>>, %arg6: memref<1x256xf32, #tpu.memory_space<vmem>>, %arg7: memref<64x256xf32, #tpu.memory_space<vmem>>) attributes {dimension_semantics = [#tpu.dimension_semantics<parallel>, #tpu.dimension_semantics<arbitrary>], iteration_bounds = array<i64: 1, 2>, scalar_prefetch = 0 : i64, scratch_operands = 0 : i64, tpu.core_type = #tpu.core_type<tc>, window_params = [{transform_indices = @transform_0, window_bounds = array<i64: 64, 256>}, {transform_indices = @transform_1, window_bounds = array<i64: 256, 512>}, {transform_indices = @transform_2, window_bounds = array<i64: 2, 512>}, {transform_indices = @transform_3, window_bounds = array<i64: 512, 256>}, {pipeline_mode = #tpu.pipeline_mode<synchronous>, transform_indices = @transform_4, window_bounds = array<i64: 1, 256>}, {transform_indices = @transform_5, window_bounds = array<i64: 64, 256>}]} {
    %c0_i32 = arith.constant 0 : i32
    %0 = arith.cmpi eq, %arg1, %c0_i32 : i32
    %1 = arith.extui %0 : i1 to i32
    %c0_i32_0 = arith.constant 0 : i32
    %2 = arith.cmpi ne, %1, %c0_i32_0 : i32
    scf.if %2 {
      %c0_15 = arith.constant 0 : index
      %c0_16 = arith.constant 0 : index
      %22 = vector.load %arg6[%c0_15, %c0_16] : memref<1x256xf32, #tpu.memory_space<vmem>>, vector<1x256xf32>
      %23 = vector.shape_cast %22 : vector<1x256xf32> to vector<1x256xf32>
      %24 = vector.broadcast %23 : vector<1x256xf32> to vector<64x256xf32>
      %c0_17 = arith.constant 0 : index
      %c0_18 = arith.constant 0 : index
      %25 = vector.load %arg7[%c0_17, %c0_18] : memref<64x256xf32, #tpu.memory_space<vmem>>, vector<64x256xf32>
      tpu.vector_store %arg7[%c0_17, %c0_18], %24 {strides = array<i32>} : memref<64x256xf32, #tpu.memory_space<vmem>>, vector<64x256xf32>,
    } else {
    }
    %c0 = arith.constant 0 : index
    %c0_1 = arith.constant 0 : index
    %3 = vector.load %arg7[%c0, %c0_1] : memref<64x256xf32, #tpu.memory_space<vmem>>, vector<64x256xf32>
    %c0_2 = arith.constant 0 : index
    %c0_3 = arith.constant 0 : index
    %4 = vector.load %arg2[%c0_2, %c0_3] : memref<64x256xf32, #tpu.memory_space<vmem>>, vector<64x256xf32>
    %c0_4 = arith.constant 0 : index
    %c0_5 = arith.constant 0 : index
    %5 = vector.load %arg3[%c0_4, %c0_5] : memref<256x512xf32, #tpu.memory_space<vmem>>, vector<256x512xf32>
    %cst = arith.constant dense<0.000000e+00> : vector<64x512xf32>
    %6 = tpu.matmul %4, %5, %cst {dimension_numbers = #tpu.dot_dimension_numbers<[1], [0], [0], [1], [0, 0, 1, 1], [], []>} : vector<64x256xf32>, vector<256x512xf32>, vector<64x512xf32> -> vector<64x512xf32>
    %c0_6 = arith.constant 0 : index
    %c0_7 = arith.constant 0 : index
    %7 = vector.load %arg4[%c0_6, %c0_7] : memref<2x512xf32, #tpu.memory_space<vmem>>, vector<2x512xf32>
    %8 = vector.extract_strided_slice %7 {offsets = [0, 0], sizes = [1, 512], strides = [1, 1]} : vector<2x512xf32> to vector<1x512xf32>
    %9 = vector.broadcast %8 : vector<1x512xf32> to vector<64x512xf32>
    %10 = arith.addf %6, %9 : vector<64x512xf32>
    %11 = vector.extract_strided_slice %7 {offsets = [1, 0], sizes = [1, 512], strides = [1, 1]} : vector<2x512xf32> to vector<1x512xf32>
    %12 = vector.broadcast %11 : vector<1x512xf32> to vector<64x512xf32>
    %13 = arith.cmpf ogt, %10, %12 : vector<64x512xf32>
    %cst_8 = arith.constant 0.000000e+00 : f32
    %14 = vector.broadcast %cst_8 : f32 to vector<64x512xf32>
    %15 = arith.maximumf %10, %14 : vector<64x512xf32>
    %cst_9 = arith.constant 0.000000e+00 : f32
    %16 = vector.broadcast %cst_9 : f32 to vector<64x512xf32>
    %17 = arith.select %13, %15, %16 : vector<64x512xi1>, vector<64x512xf32>
    %c0_10 = arith.constant 0 : index
    %c0_11 = arith.constant 0 : index
    %18 = vector.load %arg5[%c0_10, %c0_11] : memref<512x256xf32, #tpu.memory_space<vmem>>, vector<512x256xf32>
    %cst_12 = arith.constant dense<0.000000e+00> : vector<64x256xf32>
    %19 = tpu.matmul %17, %18, %cst_12 {dimension_numbers = #tpu.dot_dimension_numbers<[1], [0], [0], [1], [0, 0, 1, 1], [], []>} : vector<64x512xf32>, vector<512x256xf32>, vector<64x256xf32> -> vector<64x256xf32>
    %20 = arith.addf %3, %19 : vector<64x256xf32>
    %c0_13 = arith.constant 0 : index
    %c0_14 = arith.constant 0 : index
    %21 = vector.load %arg7[%c0_13, %c0_14] : memref<64x256xf32, #tpu.memory_space<vmem>>, vector<64x256xf32>
    tpu.vector_store %arg7[%c0_13, %c0_14], %20 {strides = array<i32>} : memref<64x256xf32, #tpu.memory_space<vmem>>, vector<64x256xf32>,
    return
  }
  func.func @transform_0(%arg0: i32, %arg1: i32) -> (i32, i32) {
    %c0_i32 = arith.constant 0 : i32
    %c0_i32_0 = arith.constant 0 : i32
    return %arg0, %c0_i32 : i32, i32
  }
  func.func @transform_1(%arg0: i32, %arg1: i32) -> (i32, i32) {
    %c0_i32 = arith.constant 0 : i32
    %c0_i32_0 = arith.constant 0 : i32
    return %c0_i32, %arg1 : i32, i32
  }
  func.func @transform_2(%arg0: i32, %arg1: i32) -> (i32, i32) {
    %c0_i32 = arith.constant 0 : i32
    %c0_i32_0 = arith.constant 0 : i32
    return %c0_i32, %arg1 : i32, i32
  }
  func.func @transform_3(%arg0: i32, %arg1: i32) -> (i32, i32) {
    %c0_i32 = arith.constant 0 : i32
    %c0_i32_0 = arith.constant 0 : i32
    return %arg1, %c0_i32 : i32, i32
  }
  func.func @transform_4(%arg0: i32, %arg1: i32) -> (i32, i32) {
    %c0_i32 = arith.constant 0 : i32
    %c0_i32_0 = arith.constant 0 : i32
    %c0_i32_1 = arith.constant 0 : i32
    return %c0_i32, %c0_i32_0 : i32, i32
  }
  func.func @transform_5(%arg0: i32, %arg1: i32) -> (i32, i32) {
    %c0_i32 = arith.constant 0 : i32
    %c0_i32_0 = arith.constant 0 : i32
    return %arg0, %c0_i32 : i32, i32
  }
}

</mosaic_0001>

<llo_original>
// kernel: tpu_custom_call.1
$region0: #{tpu_custom_call.1}
  #allocation0 [shape = 'u32[]', space=smem, size = 0x4, offset = 0x4, fixed_abs, tag = 'smem constant byte address 0x4 - core index']
  #allocation1 [shape = 'u32[144,128]{1,0:T(1,128)}', space=vmem, size = 0x12000, scoped, tag = 'internal scratch']
  %s0 = inlined_call_operand.hbm [shape: f32[64,256], index: 0, kind: input, shape index: {}]
  %s1 = inlined_call_operand.hbm [shape: f32[256,1024], index: 1, kind: input, shape index: {}]
  %s2 = inlined_call_operand.hbm [shape: f32[2,1024], index: 2, kind: input, shape index: {}]
  %s3 = inlined_call_operand.hbm [shape: f32[1024,256], index: 3, kind: input, shape index: {}]
  %s4 = inlined_call_operand.vmem [shape: f32[1,256], index: 4, kind: input, shape index: {}]
  %s5 = inlined_call_operand.hbm [shape: f32[64,256], index: 5, kind: output, shape index: {}]
  %s6 = sld [smem:[#allocation0]]
  $region73: #{tpu_custom_call.1} parent=0
    _
  %s8 = ssub.s32 1, %s6
  %s9 = scalar_select 0, %s8, %s6
  $region1: #{tpu_custom_call.1} parent=0
    #allocation2 [shape = 'u8[65536]{0}', space=vmem, size = 0x10000, scoped, tag = 'input window, operand 0, single buffered']
    #allocation3 [shape = 's32[2]{0}', space=sflag, size = 0x8, scoped, tag = 'scoped memory for tpu_custom_call.1']
    #allocation4 [shape = 's32[2]{0}', space=sflag, size = 0x8, scoped, tag = 'scoped memory for tpu_custom_call.1']
    #allocation5 [shape = 'u8[1048576]{0}', space=vmem, size = 0x100000, scoped, tag = 'input window, operand 1']
    #allocation6 [shape = 's32[2]{0}', space=sflag, size = 0x8, scoped, tag = 'scoped memory for tpu_custom_call.1']
    #allocation7 [shape = 'u8[8192]{0}', space=vmem, size = 0x2000, scoped, tag = 'input window, operand 2']
    #allocation8 [shape = 'u8[1048576]{0}', space=vmem, size = 0x100000, scoped, tag = 'input window, operand 3']
    #allocation9 [shape = 's32[2]{0}', space=sflag, size = 0x8, scoped, tag = 'scoped memory for tpu_custom_call.1']
    #allocation10 [shape = 'u8[65536]{0}', space=vmem, size = 0x10000, scoped, tag = 'output window, operand 0, single buffered']
    %10 = vsyncpa [#allocation3], 0
    %11 = vsyncpa [#allocation6], 0
    %s12 = scalar_lea.sflag [#allocation6], 1
    %13 = vsyncpa %s12, 0
    %14 = vsyncpa [#allocation9], 0
    %s15 = scalar_lea.sflag [#allocation9], 1
    %16 = vsyncpa %s15, 0
    %17 = vsyncpa [#allocation4], 0
    loop: start=0, step=1, limit=4
    $region2: #{tpu_custom_call.1} parent=1 // loop_pre_header
      _
    $region3: #{tpu_custom_call.1} parent=1 // loop_header
      %s19 = sphi 0, %s23
      %p20 = scmp.ge.s32.totalorder %s19, 4
      %s26 = sphi 0, %s38
      %s27 = sphi 0, %s34
      %s28 = sphi 0, %s26
      %s29 = sphi 0, %s27
      %s30 = sphi 0, %s28
      %s31 = sphi 0, %s29
      %s41 = sphi 0, %s43
      %s44 = sphi 0, %s41
      %s45 = sphi 0, %s44
      %s61 = sphi 0, %s45
      %s67 = sphi 0, %s69
      %s70 = sphi 0, %s67
      %s71 = sphi 0, %s70
      %s87 = sphi 0, %s71
      %s93 = sphi 0, %s95
      %s96 = sphi 0, %s93
      %s97 = sphi 0, %s96
      %s113 = sphi 0, %s97
      %s119 = sphi 0, %s121
      %s122 = sphi 0, %s119
      %s123 = sphi 0, %s122
      %s139 = sphi 0, %s123
      %s143 = sphi 0, %s143
      %s145 = sphi 0, %s143
      %s146 = sphi 0, %s145
      %s160 = sphi 0, %s146
      %s166 = sphi 0, %s168
      %s169 = sphi 0, %s166
      %s170 = sphi 0, %s169
      %s186 = sphi 0, %s170
    $region4: #{tpu_custom_call.1} parent=1 // loop_header_branch
      %22 = sbr.rel (%p20) target = $region8
    $region5: #{tpu_custom_call.1} parent=1 // loop_body
      %s24 = ssub.s32 %s19, 1
      %s25 = ssub.s32 %s19, 2
      %s32 = sadd.s32 1, %s27
      %p33 = scmp.ge.s32.totalorder %s32, 2
      %s34 = scalar_select %p33, 0, %s32
      %s35 = sadd.s32 1, %s26
      %s36 = scalar_select %p33, %s35, %s26
      %p37 = scmp.ge.s32.totalorder %s36, 1
      %s38 = scalar_select %p37, 0, %s36
      %s39 = ssub.s32 %s26, %s38
      %p40 = scmp.eq.s32.totalorder %s39, 0
      %s42 = sadd.s32 %s41, 1
      %s43 = scalar_select %p40, %s41, %s42
      %p46 = pneg %p40
      %p47 = scmp.eq.s32.totalorder %s19, 1
      %p48 = por %p46, %p47
      %p49 = scmp.ne.s32.totalorder %s41, %s44
      %p50 = scmp.eq.s32.totalorder %s19, 0
      %p51 = por %p49, %p50
      %p52 = scmp.ne.s32.totalorder %s41, %s44
      %p53 = scmp.eq.s32.totalorder %s24, 1
      %p54 = por %p52, %p53
      %p55 = scmp.ne.s32.totalorder %s44, %s45
      %p56 = scmp.eq.s32.totalorder %s24, 0
      %p57 = por %p55, %p56
      %p58 = scmp.ne.s32.totalorder %s44, %s45
      %p59 = scmp.eq.s32.totalorder %s25, 1
      %p60 = por %p58, %p59
      %p62 = scmp.ne.s32.totalorder %s45, %s61
      %p63 = scmp.eq.s32.totalorder %s25, 0
      %p64 = por %p62, %p63
      %s65 = ssub.s32 %s27, %s34
      %p66 = scmp.eq.s32.totalorder %s65, 0
      %s68 = sadd.s32 %s67, 1
      %s69 = scalar_select %p66, %s67, %s68
      %p72 = pneg %p66
      %p73 = scmp.eq.s32.totalorder %s19, 1
      %p74 = por %p72, %p73
      %p75 = scmp.ne.s32.totalorder %s67, %s70
      %p76 = scmp.eq.s32.totalorder %s19, 0
      %p77 = por %p75, %p76
      %p78 = scmp.ne.s32.totalorder %s67, %s70
      %p79 = scmp.eq.s32.totalorder %s24, 1
      %p80 = por %p78, %p79
      %p81 = scmp.ne.s32.totalorder %s70, %s71
      %p82 = scmp.eq.s32.totalorder %s24, 0
      %p83 = por %p81, %p82
      %p84 = scmp.ne.s32.totalorder %s70, %s71
      %p85 = scmp.eq.s32.totalorder %s25, 1
      %p86 = por %p84, %p85
      %p88 = scmp.ne.s32.totalorder %s71, %s87
      %p89 = scmp.eq.s32.totalorder %s25, 0
      %p90 = por %p88, %p89
      %s91 = ssub.s32 %s27, %s34
      %p92 = scmp.eq.s32.totalorder %s91, 0
      %s94 = sadd.s32 %s93, 1
      %s95 = scalar_select %p92, %s93, %s94
      %p98 = pneg %p92
      %p99 = scmp.eq.s32.totalorder %s19, 1
      %p100 = por %p98, %p99
      %p101 = scmp.ne.s32.totalorder %s93, %s96
      %p102 = scmp.eq.s32.totalorder %s19, 0
      %p103 = por %p101, %p102
      %p104 = scmp.ne.s32.totalorder %s93, %s96
      %p105 = scmp.eq.s32.totalorder %s24, 1
      %p106 = por %p104, %p105
      %p107 = scmp.ne.s32.totalorder %s96, %s97
      %p108 = scmp.eq.s32.totalorder %s24, 0
      %p109 = por %p107, %p108
      %p110 = scmp.ne.s32.totalorder %s96, %s97
      %p111 = scmp.eq.s32.totalorder %s25, 1
      %p112 = por %p110, %p111
      %p114 = scmp.ne.s32.totalorder %s97, %s113
      %p115 = scmp.eq.s32.totalorder %s25, 0
      %p116 = por %p114, %p115
      %s117 = ssub.s32 %s27, %s34
      %p118 = scmp.eq.s32.totalorder %s117, 0
      %s120 = sadd.s32 %s119, 1
      %s121 = scalar_select %p118, %s119, %s120
      %p124 = pneg %p118
      %p125 = scmp.eq.s32.totalorder %s19, 1
      %p126 = por %p124, %p125
      %p127 = scmp.ne.s32.totalorder %s119, %s122
      %p128 = scmp.eq.s32.totalorder %s19, 0
      %p129 = por %p127, %p128
      %p130 = scmp.ne.s32.totalorder %s119, %s122
      %p131 = scmp.eq.s32.totalorder %s24, 1
      %p132 = por %p130, %p131
      %p133 = scmp.ne.s32.totalorder %s122, %s123
      %p134 = scmp.eq.s32.totalorder %s24, 0
      %p135 = por %p133, %p134
      %p136 = scmp.ne.s32.totalorder %s122, %s123
      %p137 = scmp.eq.s32.totalorder %s25, 1
      %p138 = por %p136, %p137
      %p140 = scmp.ne.s32.totalorder %s123, %s139
      %p141 = scmp.eq.s32.totalorder %s25, 0
      %p142 = por %p140, %p141
      %s144 = sadd.s32 %s143, 1
      %p147 = scmp.eq.s32.totalorder %s19, 1
      %p148 = scmp.ne.s32.totalorder %s143, %s145
      %p149 = scmp.eq.s32.totalorder %s19, 0
      %p150 = por %p148, %p149
      %p151 = scmp.ne.s32.totalorder %s143, %s145
      %p152 = scmp.eq.s32.totalorder %s24, 1
      %p153 = por %p151, %p152
      %p154 = scmp.ne.s32.totalorder %s145, %s146
      %p155 = scmp.eq.s32.totalorder %s24, 0
      %p156 = por %p154, %p155
      %p157 = scmp.ne.s32.totalorder %s145, %s146
      %p158 = scmp.eq.s32.totalorder %s25, 1
      %p159 = por %p157, %p158
      %p161 = scmp.ne.s32.totalorder %s146, %s160
      %p162 = scmp.eq.s32.totalorder %s25, 0
      %p163 = por %p161, %p162
      %s164 = ssub.s32 %s26, %s38
      %p165 = scmp.eq.s32.totalorder %s164, 0
      %s167 = sadd.s32 %s166, 1
      %s168 = scalar_select %p165, %s166, %s167
      %p171 = pneg %p165
      %p172 = scmp.eq.s32.totalorder %s19, 1
      %p173 = por %p171, %p172
      %p174 = scmp.ne.s32.totalorder %s166, %s169
      %p175 = scmp.eq.s32.totalorder %s19, 0
      %p176 = por %p174, %p175
      %p177 = scmp.ne.s32.totalorder %s166, %s169
      %p178 = scmp.eq.s32.totalorder %s24, 1
      %p179 = por %p177, %p178
      %p180 = scmp.ne.s32.totalorder %s169, %s170
      %p181 = scmp.eq.s32.totalorder %s24, 0
      %p182 = por %p180, %p181
      %p183 = scmp.ne.s32.totalorder %s169, %s170
      %p184 = scmp.eq.s32.totalorder %s25, 1
      %p185 = por %p183, %p184
      %p187 = scmp.ne.s32.totalorder %s170, %s186
      %p188 = scmp.eq.s32.totalorder %s25, 0
      %p189 = por %p187, %p188
      %p190 = scmp.le.s32.totalorder 1, %s19
      %p191 = scmp.lt.s32.totalorder %s19, 3
      %p192 = pnand %p190, %p191
      %p193 = pneg %p192
      // Predicated region
      $region9: #{tpu_custom_call.1} parent=5 // pred_check
        _
      $region10: #{tpu_custom_call.1} parent=5 // pred_check_branch
        %195 = sbr.rel (%p192) target = $region12
      $region11: #{tpu_custom_call.1} parent=5 // pred_region
        %s196 = ssub.s32 %s19, 1
        // Predicated region
        $region13: #{tpu_custom_call.1} parent=11 // pred_check
          %p197 = pneg %p57
        $region14: #{tpu_custom_call.1} parent=11 // pred_check_branch
          %199 = sbr.rel (%p197) target = $region16
        $region15: #{tpu_custom_call.1} parent=11 // pred_region
          %s200 = smul.u32 8, %s28
          %s202 = ssub.s32 2048, 2048
          %203 = vsyncadd [#allocation3], %s202
          %s204 = smul.addr %s200, 2
          %s205 = smul.addr %s204, 128
          %s206 = scalar_lea.hbm %s0, %s205
          %s207 = sshll.u32 [#allocation2], 4
          %s208 = int_to_ptr.vmem [resolvable:$true] %s207
          %213 = dma.hbm_to_vmem [thread:$0]  %s206, 2048, %s208, [#allocation3], 256, 256, 16
        $region16: #{tpu_custom_call.1} parent=11 // pred_fallthru
          _
        // Predicated region
        $region17: #{tpu_custom_call.1} parent=11 // pred_check
          %p214 = pneg %p156
        $region18: #{tpu_custom_call.1} parent=11 // pred_check_branch
          %216 = sbr.rel (%p214) target = $region20
        $region19: #{tpu_custom_call.1} parent=11 // pred_region
          _
        $region20: #{tpu_custom_call.1} parent=11 // pred_fallthru
          _
      $region12: #{tpu_custom_call.1} parent=5 // pred_fallthru
        _
      %p217 = scmp.lt.s32.totalorder %s19, 2
      // Predicated region
      $region21: #{tpu_custom_call.1} parent=5 // pred_check
        %p218 = pneg %p217
      $region22: #{tpu_custom_call.1} parent=5 // pred_check_branch
        %220 = sbr.rel (%p218) target = $region24
      $region23: #{tpu_custom_call.1} parent=5 // pred_region
        // Predicated region
        $region25: #{tpu_custom_call.1} parent=23 // pred_check
          %p221 = pneg %p77
        $region26: #{tpu_custom_call.1} parent=23 // pred_check_branch
          %223 = sbr.rel (%p221) target = $region28
        $region27: #{tpu_custom_call.1} parent=23 // pred_region
          %s224 = sand.u32 %s19, 1
          %s225 = scalar_lea.sflag [#allocation6], %s224
          %s226 = sand.u32 %s67, 1
          %s227 = smul.addr %s226, 1024
          %s228 = scalar_lea.vmem [#allocation5], %s227
          %s229 = smul.u32 4, %s27
          %s231 = ssub.s32 16384, 16384
          %232 = vsyncadd %s225, %s231
          %s233 = smul.addr %s229, 128
          %s234 = scalar_lea.hbm %s1, %s233
          %s235 = sshll.u32 %s228, 4
          %s236 = int_to_ptr.vmem [resolvable:$true] %s235
          %241 = dma.hbm_to_vmem [thread:$0]  %s234, 16384, %s236, %s225, 1024, 512, 32
        $region28: #{tpu_custom_call.1} parent=23 // pred_fallthru
          _
        // Predicated region
        $region29: #{tpu_custom_call.1} parent=23 // pred_check
          %p242 = pneg %p103
        $region30: #{tpu_custom_call.1} parent=23 // pred_check_branch
          %244 = sbr.rel (%p242) target = $region32
        $region31: #{tpu_custom_call.1} parent=23 // pred_region
          %s245 = sand.u32 %s19, 1
          %s246 = scalar_lea.sflag [#allocation6], %s245
          %s247 = sand.u32 %s93, 1
          %s248 = smul.addr %s247, 8
          %s249 = scalar_lea.vmem [#allocation7], %s248
          %s250 = smul.u32 4, %s27
          %s252 = ssub.s32 128, 128
          %253 = vsyncadd %s246, %s252
          %s254 = smul.addr %s250, 32
          %s255 = scalar_lea.hbm %s2, %s254
          %s257 = sshll.u32 %s249, 4
          %s258 = int_to_ptr.vmem [resolvable:$true] %s257
          %260 = dma.hbm_to_vmem [thread:$0]  %s255, 128, %s258, %s246
        $region32: #{tpu_custom_call.1} parent=23 // pred_fallthru
          _
        // Predicated region
        $region33: #{tpu_custom_call.1} parent=23 // pred_check
          %p261 = pneg %p129
        $region34: #{tpu_custom_call.1} parent=23 // pred_check_branch
          %263 = sbr.rel (%p261) target = $region36
        $region35: #{tpu_custom_call.1} parent=23 // pred_region
          %s264 = sand.u32 %s119, 1
          %s265 = scalar_lea.sflag [#allocation9], %s264
          %s266 = sand.u32 %s119, 1
          %s267 = smul.addr %s266, 1024
          %s268 = scalar_lea.vmem [#allocation8], %s267
          %s269 = smul.u32 64, %s27
          %s271 = ssub.s32 16384, 16384
          %272 = vsyncadd %s265, %s271
          %s273 = smul.addr %s269, 2
          %s274 = smul.addr %s273, 128
          %s275 = scalar_lea.hbm %s3, %s274
          %s276 = sshll.u32 %s268, 4
          %s277 = int_to_ptr.vmem [resolvable:$true] %s276
          %282 = dma.hbm_to_vmem [thread:$0]  %s275, 16384, %s277, %s265, 256, 256, 16
        $region36: #{tpu_custom_call.1} parent=23 // pred_fallthru
          _
      $region24: #{tpu_custom_call.1} parent=5 // pred_fallthru
        _
      %p283 = scmp.le.s32.totalorder 1, %s19
      %p284 = scmp.lt.s32.totalorder %s19, 3
      %p285 = pnand %p283, %p284
      %p286 = pneg %p285
      // Predicated region
      $region37: #{tpu_custom_call.1} parent=5 // pred_check
        _
      $region38: #{tpu_custom_call.1} parent=5 // pred_check_branch
        %288 = sbr.rel (%p285) target = $region40
      $region39: #{tpu_custom_call.1} parent=5 // pred_region
        %s289 = ssub.s32 %s19, 1
        // Predicated region
        $region41: #{tpu_custom_call.1} parent=39 // pred_check
          %p290 = pneg %p57
        $region42: #{tpu_custom_call.1} parent=39 // pred_check_branch
          %292 = sbr.rel (%p290) target = $region44
        $region43: #{tpu_custom_call.1} parent=39 // pred_region
          %293 = dma.done [#allocation3], 2048
        $region44: #{tpu_custom_call.1} parent=39 // pred_fallthru
          _
        %s294 = sand.u32 %s24, 1
        %s295 = scalar_lea.sflag [#allocation6], %s294
        %s296 = sand.u32 %s70, 1
        %s297 = smul.addr %s296, 1024
        %s298 = scalar_lea.vmem [#allocation5], %s297
        // Predicated region
        $region45: #{tpu_custom_call.1} parent=39 // pred_check
          %p299 = pneg %p83
        $region46: #{tpu_custom_call.1} parent=39 // pred_check_branch
          %301 = sbr.rel (%p299) target = $region48
        $region47: #{tpu_custom_call.1} parent=39 // pred_region
          %302 = dma.done %s295, 16384
        $region48: #{tpu_custom_call.1} parent=39 // pred_fallthru
          _
        %s303 = sand.u32 %s24, 1
        %s304 = scalar_lea.sflag [#allocation6], %s303
        %s305 = sand.u32 %s96, 1
        %s306 = smul.addr %s305, 8
        %s307 = scalar_lea.vmem [#allocation7], %s306
        // Predicated region
        $region49: #{tpu_custom_call.1} parent=39 // pred_check
          %p308 = pneg %p109
        $region50: #{tpu_custom_call.1} parent=39 // pred_check_branch
          %310 = sbr.rel (%p308) target = $region52
        $region51: #{tpu_custom_call.1} parent=39 // pred_region
          %311 = dma.done %s304, 128
        $region52: #{tpu_custom_call.1} parent=39 // pred_fallthru
          _
        %s312 = sand.u32 %s122, 1
        %s313 = scalar_lea.sflag [#allocation9], %s312
        %s314 = sand.u32 %s122, 1
        %s315 = smul.addr %s314, 1024
        %s316 = scalar_lea.vmem [#allocation8], %s315
        // Predicated region
        $region53: #{tpu_custom_call.1} parent=39 // pred_check
          %p317 = pneg %p135
        $region54: #{tpu_custom_call.1} parent=39 // pred_check_branch
          %319 = sbr.rel (%p317) target = $region56
        $region55: #{tpu_custom_call.1} parent=39 // pred_region
          %320 = dma.done %s313, 16384
        $region56: #{tpu_custom_call.1} parent=39 // pred_fallthru
          _
        %p321 = pneg %p57
        %p322 = pneg %p54
        %s323 = sand.u32 %s24, 1
        %s324 = scalar_lea.sflag [#allocation6], %s323
        %s325 = sand.u32 %s70, 1
        %s326 = smul.addr %s325, 1024
        %s327 = scalar_lea.vmem [#allocation5], %s326
        %p328 = pneg %p83
        %p329 = pneg %p80
        %s330 = sand.u32 %s24, 1
        %s331 = scalar_lea.sflag [#allocation6], %s330
        %s332 = sand.u32 %s96, 1
        %s333 = smul.addr %s332, 8
        %s334 = scalar_lea.vmem [#allocation7], %s333
        %p335 = pneg %p109
        %p336 = pneg %p106
        %s337 = sand.u32 %s122, 1
        %s338 = scalar_lea.sflag [#allocation9], %s337
        %s339 = sand.u32 %s122, 1
        %s340 = smul.addr %s339, 1024
        %s341 = scalar_lea.vmem [#allocation8], %s340
        %p342 = pneg %p135
        %p343 = pneg %p132
        %p344 = pneg %p156
        %p345 = pneg %p153
        %p346 = pneg %p182
        %p347 = pneg %p179
        %s348 = smul.u32 8, %s28
        %s349 = smul.u32 4, %s29
        %s350 = smul.u32 4, %s29
        %s351 = smul.u32 64, %s29
        %s352 = smul.u32 8, %s28
        %p353 = scmp.eq.s32.totalorder %s29, 0
        // Predicated region
        $region57: #{tpu_custom_call.1} parent=39 // pred_check
          %p354 = pneg %p353
        $region58: #{tpu_custom_call.1} parent=39 // pred_check_branch
          %356 = sbr.rel (%p354) target = $region60
        $region59: #{tpu_custom_call.1} parent=39 // pred_region
          %v357 = vld [vmem:[%s4] sm:$0x3]
          %v359 = vlaneseq
          %v360 = vshrl.u32 %v359, 7
          %v361 = vsub.s32 0, %v360
          %v362 = vrot.slane %v357, %v361
          %v363 = vlaneseq
          %v364 = vshrl.u32 %v363, 7
          %v365 = vsub.s32 1, %v364
          %v366 = vrot.slane %v357, %v365
          %369 = vst [vmem:[#allocation10] sm:$0xff] %v362
          %370 = vst [vmem:[#allocation10 + $0x8] sm:$0xff] %v366
          %371 = vst [vmem:[#allocation10 + $0x10] sm:$0xff] %v362
          %372 = vst [vmem:[#allocation10 + $0x18] sm:$0xff] %v366
          %373 = vst [vmem:[#allocation10 + $0x20] sm:$0xff] %v362
          %374 = vst [vmem:[#allocation10 + $0x28] sm:$0xff] %v366
          %375 = vst [vmem:[#allocation10 + $0x30] sm:$0xff] %v362
          %376 = vst [vmem:[#allocation10 + $0x38] sm:$0xff] %v366
          %377 = vst [vmem:[#allocation10 + $0x40] sm:$0xff] %v362
          %378 = vst [vmem:[#allocation10 + $0x48] sm:$0xff] %v366
          %379 = vst [vmem:[#allocation10 + $0x50] sm:$0xff] %v362
          %380 = vst [vmem:[#allocation10 + $0x58] sm:$0xff] %v366
          %381 = vst [vmem:[#allocation10 + $0x60] sm:$0xff] %v362
          %382 = vst [vmem:[#allocation10 + $0x68] sm:$0xff] %v366
          %383 = vst [vmem:[#allocation10 + $0x70] sm:$0xff] %v362
          %384 = vst [vmem:[#allocation10 + $0x78] sm:$0xff] %v366
        $region60: #{tpu_custom_call.1} parent=39 // pred_fallthru
          _
        %v385 = vld [vmem:[#allocation10] sm:$0xff]
        %v386 = vld [vmem:[#allocation10 + $0x8] sm:$0xff]
        %v387 = vld [vmem:[#allocation10 + $0x10] sm:$0xff]
        %v388 = vld [vmem:[#allocation10 + $0x18] sm:$0xff]
        %v389 = vld [vmem:[#allocation10 + $0x20] sm:$0xff]
        %v390 = vld [vmem:[#allocation10 + $0x28] sm:$0xff]
        %v391 = vld [vmem:[#allocation10 + $0x30] sm:$0xff]
        %v392 = vld [vmem:[#allocation10 + $0x38] sm:$0xff]
        %v393 = vld [vmem:[#allocation10 + $0x40] sm:$0xff]
        %v394 = vld [vmem:[#allocation10 + $0x48] sm:$0xff]
        %v395 = vld [vmem:[#allocation10 + $0x50] sm:$0xff]
        %v396 = vld [vmem:[#allocation10 + $0x58] sm:$0xff]
        %v397 = vld [vmem:[#allocation10 + $0x60] sm:$0xff]
        %v398 = vld [vmem:[#allocation10 + $0x68] sm:$0xff]
        %v399 = vld [vmem:[#allocation10 + $0x70] sm:$0xff]
        %v400 = vld [vmem:[#allocation10 + $0x78] sm:$0xff]
        %v401 = vld [vmem:[#allocation2] sm:$0xff]
        %v402 = vld [vmem:[#allocation2 + $0x8] sm:$0xff]
        %v403 = vld [vmem:[#allocation2 + $0x10] sm:$0xff]
        %v404 = vld [vmem:[#allocation2 + $0x18] sm:$0xff]
        %v405 = vld [vmem:[#allocation2 + $0x20] sm:$0xff]
        %v406 = vld [vmem:[#allocation2 + $0x28] sm:$0xff]
        %v407 = vld [vmem:[#allocation2 + $0x30] sm:$0xff]
        %v408 = vld [vmem:[#allocation2 + $0x38] sm:$0xff]
        %v409 = vld [vmem:[#allocation2 + $0x40] sm:$0xff]
        %v410 = vld [vmem:[#allocation2 + $0x48] sm:$0xff]
        %v411 = vld [vmem:[#allocation2 + $0x50] sm:$0xff]
        %v412 = vld [vmem:[#allocation2 + $0x58] sm:$0xff]
        %v413 = vld [vmem:[#allocation2 + $0x60] sm:$0xff]
        %v414 = vld [vmem:[#allocation2 + $0x68] sm:$0xff]
        %v415 = vld [vmem:[#allocation2 + $0x70] sm:$0xff]
        %v416 = vld [vmem:[#allocation2 + $0x78] sm:$0xff]
        %v417 = vld [vmem:[%s298] sm:$0xff]
        %v418 = vld [vmem:[%s298 + $0x8] sm:$0xff]
        %v419 = vld [vmem:[%s298 + $0x10] sm:$0xff]
        %v420 = vld [vmem:[%s298 + $0x18] sm:$0xff]
        %v421 = vld [vmem:[%s298 + $0x20] sm:$0xff]
        %v422 = vld [vmem:[%s298 + $0x28] sm:$0xff]
        %v423 = vld [vmem:[%s298 + $0x30] sm:$0xff]
        %v424 = vld [vmem:[%s298 + $0x38] sm:$0xff]
        %v425 = vld [vmem:[%s298 + $0x40] sm:$0xff]
        %v426 = vld [vmem:[%s298 + $0x48] sm:$0xff]
        %v427 = vld [vmem:[%s298 + $0x50] sm:$0xff]
        %v428 = vld [vmem:[%s298 + $0x58] sm:$0xff]
        %v429 = vld [vmem:[%s298 + $0x60] sm:$0xff]
        %v430 = vld [vmem:[%s298 + $0x68] sm:$0xff]
        %v431 = vld [vmem:[%s298 + $0x70] sm:$0xff]
        %v432 = vld [vmem:[%s298 + $0x78] sm:$0xff]
        %v433 = vld [vmem:[%s298 + $0x80] sm:$0xff]
        %v434 = vld [vmem:[%s298 + $0x88] sm:$0xff]
        %v435 = vld [vmem:[%s298 + $0x90] sm:$0xff]
        %v436 = vld [vmem:[%s298 + $0x98] sm:$0xff]
        %v437 = vld [vmem:[%s298 + $0xa0] sm:$0xff]
        %v438 = vld [vmem:[%s298 + $0xa8] sm:$0xff]
        %v439 = vld [vmem:[%s298 + $0xb0] sm:$0xff]
        %v440 = vld [vmem:[%s298 + $0xb8] sm:$0xff]
        %v441 = vld [vmem:[%s298 + $0xc0] sm:$0xff]
        %v442 = vld [vmem:[%s298 + $0xc8] sm:$0xff]
        %v443 = vld [vmem:[%s298 + $0xd0] sm:$0xff]
        %v444 = vld [vmem:[%s298 + $0xd8] sm:$0xff]
        %v445 = vld [vmem:[%s298 + $0xe0] sm:$0xff]
        %v446 = vld [vmem:[%s298 + $0xe8] sm:$0xff]
        %v447 = vld [vmem:[%s298 + $0xf0] sm:$0xff]
        %v448 = vld [vmem:[%s298 + $0xf8] sm:$0xff]
        %v449 = vld [vmem:[%s298 + $0x100] sm:$0xff]
        %v450 = vld [vmem:[%s298 + $0x108] sm:$0xff]
        %v451 = vld [vmem:[%s298 + $0x110] sm:$0xff]
        %v452 = vld [vmem:[%s298 + $0x118] sm:$0xff]
        %v453 = vld [vmem:[%s298 + $0x120] sm:$0xff]
        %v454 = vld [vmem:[%s298 + $0x128] sm:$0xff]
        %v455 = vld [vmem:[%s298 + $0x130] sm:$0xff]
        %v456 = vld [vmem:[%s298 + $0x138] sm:$0xff]
        %v457 = vld [vmem:[%s298 + $0x140] sm:$0xff]
        %v458 = vld [vmem:[%s298 + $0x148] sm:$0xff]
        %v459 = vld [vmem:[%s298 + $0x150] sm:$0xff]
        %v460 = vld [vmem:[%s298 + $0x158] sm:$0xff]
        %v461 = vld [vmem:[%s298 + $0x160] sm:$0xff]
        %v462 = vld [vmem:[%s298 + $0x168] sm:$0xff]
        %v463 = vld [vmem:[%s298 + $0x170] sm:$0xff]
        %v464 = vld [vmem:[%s298 + $0x178] sm:$0xff]
        %v465 = vld [vmem:[%s298 + $0x180] sm:$0xff]
        %v466 = vld [vmem:[%s298 + $0x188] sm:$0xff]
        %v467 = vld [vmem:[%s298 + $0x190] sm:$0xff]
        %v468 = vld [vmem:[%s298 + $0x198] sm:$0xff]
        %v469 = vld [vmem:[%s298 + $0x1a0] sm:$0xff]
        %v470 = vld [vmem:[%s298 + $0x1a8] sm:$0xff]
        %v471 = vld [vmem:[%s298 + $0x1b0] sm:$0xff]
        %v472 = vld [vmem:[%s298 + $0x1b8] sm:$0xff]
        %v473 = vld [vmem:[%s298 + $0x1c0] sm:$0xff]
        %v474 = vld [vmem:[%s298 + $0x1c8] sm:$0xff]
        %v475 = vld [vmem:[%s298 + $0x1d0] sm:$0xff]
        %v476 = vld [vmem:[%s298 + $0x1d8] sm:$0xff]
        %v477 = vld [vmem:[%s298 + $0x1e0] sm:$0xff]
        %v478 = vld [vmem:[%s298 + $0x1e8] sm:$0xff]
        %v479 = vld [vmem:[%s298 + $0x1f0] sm:$0xff]
        %v480 = vld [vmem:[%s298 + $0x1f8] sm:$0xff]
        %v481 = vld [vmem:[%s298 + $0x200] sm:$0xff]
        %v482 = vld [vmem:[%s298 + $0x208] sm:$0xff]
        %v483 = vld [vmem:[%s298 + $0x210] sm:$0xff]
        %v484 = vld [vmem:[%s298 + $0x218] sm:$0xff]
        %v485 = vld [vmem:[%s298 + $0x220] sm:$0xff]
        %v486 = vld [vmem:[%s298 + $0x228] sm:$0xff]
        %v487 = vld [vmem:[%s298 + $0x230] sm:$0xff]
        %v488 = vld [vmem:[%s298 + $0x238] sm:$0xff]
        %v489 = vld [vmem:[%s298 + $0x240] sm:$0xff]
        %v490 = vld [vmem:[%s298 + $0x248] sm:$0xff]
        %v491 = vld [vmem:[%s298 + $0x250] sm:$0xff]
        %v492 = vld [vmem:[%s298 + $0x258] sm:$0xff]
        %v493 = vld [vmem:[%s298 + $0x260] sm:$0xff]
        %v494 = vld [vmem:[%s298 + $0x268] sm:$0xff]
        %v495 = vld [vmem:[%s298 + $0x270] sm:$0xff]
        %v496 = vld [vmem:[%s298 + $0x278] sm:$0xff]
        %v497 = vld [vmem:[%s298 + $0x280] sm:$0xff]
        %v498 = vld [vmem:[%s298 + $0x288] sm:$0xff]
        %v499 = vld [vmem:[%s298 + $0x290] sm:$0xff]
        %v500 = vld [vmem:[%s298 + $0x298] sm:$0xff]
        %v501 = vld [vmem:[%s298 + $0x2a0] sm:$0xff]
        %v502 = vld [vmem:[%s298 + $0x2a8] sm:$0xff]
        %v503 = vld [vmem:[%s298 + $0x2b0] sm:$0xff]
        %v504 = vld [vmem:[%s298 + $0x2b8] sm:$0xff]
        %v505 = vld [vmem:[%s298 + $0x2c0] sm:$0xff]
        %v506 = vld [vmem:[%s298 + $0x2c8] sm:$0xff]
        %v507 = vld [vmem:[%s298 + $0x2d0] sm:$0xff]
        %v508 = vld [vmem:[%s298 + $0x2d8] sm:$0xff]
        %v509 = vld [vmem:[%s298 + $0x2e0] sm:$0xff]
        %v510 = vld [vmem:[%s298 + $0x2e8] sm:$0xff]
        %v511 = vld [vmem:[%s298 + $0x2f0] sm:$0xff]
        %v512 = vld [vmem:[%s298 + $0x2f8] sm:$0xff]
        %v513 = vld [vmem:[%s298 + $0x300] sm:$0xff]
        %v514 = vld [vmem:[%s298 + $0x308] sm:$0xff]
        %v515 = vld [vmem:[%s298 + $0x310] sm:$0xff]
        %v516 = vld [vmem:[%s298 + $0x318] sm:$0xff]
        %v517 = vld [vmem:[%s298 + $0x320] sm:$0xff]
        %v518 = vld [vmem:[%s298 + $0x328] sm:$0xff]
        %v519 = vld [vmem:[%s298 + $0x330] sm:$0xff]
        %v520 = vld [vmem:[%s298 + $0x338] sm:$0xff]
        %v521 = vld [vmem:[%s298 + $0x340] sm:$0xff]
        %v522 = vld [vmem:[%s298 + $0x348] sm:$0xff]
        %v523 = vld [vmem:[%s298 + $0x350] sm:$0xff]
        %v524 = vld [vmem:[%s298 + $0x358] sm:$0xff]
        %v525 = vld [vmem:[%s298 + $0x360] sm:$0xff]
        %v526 = vld [vmem:[%s298 + $0x368] sm:$0xff]
        %v527 = vld [vmem:[%s298 + $0x370] sm:$0xff]
        %v528 = vld [vmem:[%s298 + $0x378] sm:$0xff]
        %v529 = vld [vmem:[%s298 + $0x380] sm:$0xff]
        %v530 = vld [vmem:[%s298 + $0x388] sm:$0xff]
        %v531 = vld [vmem:[%s298 + $0x390] sm:$0xff]
        %v532 = vld [vmem:[%s298 + $0x398] sm:$0xff]
        %v533 = vld [vmem:[%s298 + $0x3a0] sm:$0xff]
        %v534 = vld [vmem:[%s298 + $0x3a8] sm:$0xff]
        %v535 = vld [vmem:[%s298 + $0x3b0] sm:$0xff]
        %v536 = vld [vmem:[%s298 + $0x3b8] sm:$0xff]
        %v537 = vld [vmem:[%s298 + $0x3c0] sm:$0xff]
        %v538 = vld [vmem:[%s298 + $0x3c8] sm:$0xff]
        %v539 = vld [vmem:[%s298 + $0x3d0] sm:$0xff]
        %v540 = vld [vmem:[%s298 + $0x3d8] sm:$0xff]
        %v541 = vld [vmem:[%s298 + $0x3e0] sm:$0xff]
        %v542 = vld [vmem:[%s298 + $0x3e8] sm:$0xff]
        %v543 = vld [vmem:[%s298 + $0x3f0] sm:$0xff]
        %v544 = vld [vmem:[%s298 + $0x3f8] sm:$0xff]
        %v545 = vld [vmem:[%s307] sm:$0xff]
        %v547 = vlaneseq
        %v548 = vshrl.u32 %v547, 7
        %v549 = vsub.s32 0, %v548
        %v550 = vrot.slane %v545, %v549
        %v551 = vlaneseq
        %v552 = vshrl.u32 %v551, 7
        %v553 = vsub.s32 2, %v552
        %v554 = vrot.slane %v545, %v553
        %v555 = vlaneseq
        %v556 = vshrl.u32 %v555, 7
        %v557 = vsub.s32 4, %v556
        %v558 = vrot.slane %v545, %v557
        %v559 = vlaneseq
        %v560 = vshrl.u32 %v559, 7
        %v561 = vsub.s32 6, %v560
        %v562 = vrot.slane %v545, %v561
        %v567 = vlaneseq
        %v568 = vshrl.u32 %v567, 7
        %v569 = vsub.s32 0, %v568
        %v570 = vrot.slane %v550, %v569
        %v571 = vlaneseq
        %v572 = vshrl.u32 %v571, 7
        %v573 = vsub.s32 0, %v572
        %v574 = vrot.slane %v554, %v573
        %v575 = vlaneseq
        %v576 = vshrl.u32 %v575, 7
        %v577 = vsub.s32 0, %v576
        %v578 = vrot.slane %v558, %v577
        %v579 = vlaneseq
        %v580 = vshrl.u32 %v579, 7
        %v581 = vsub.s32 0, %v580
        %v582 = vrot.slane %v562, %v581
        %583 = vmatprep.subr.mxu0 %v418
        %584 = vmatpush1.msra.mxu0 %v417
        %585 = vmatprep.subr.mxu0 %v422
        %586 = vmatpush1.msra.mxu0 %v421
        %587 = vmatprep.subr.mxu0 %v426
        %588 = vmatpush1.msra.mxu0 %v425
        %589 = vmatprep.subr.mxu0 %v430
        %590 = vmatpush1.msra.mxu0 %v429
        %591 = vmatprep.subr.mxu0 %v434
        %592 = vmatpush1.msra.mxu0 %v433
        %593 = vmatprep.subr.mxu0 %v438
        %594 = vmatpush1.msra.mxu0 %v437
        %595 = vmatprep.subr.mxu0 %v442
        %596 = vmatpush1.msra.mxu0 %v441
        %597 = vmatprep.subr.mxu0 %v446
        %598 = vmatpush1.msra.mxu0 %v445
        %599 = vmatprep.subr.mxu0 %v450
        %600 = vmatpush1.msra.mxu0 %v449
        %601 = vmatprep.subr.mxu0 %v454
        %602 = vmatpush1.msra.mxu0 %v453
        %603 = vmatprep.subr.mxu0 %v458
        %604 = vmatpush1.msra.mxu0 %v457
        %605 = vmatprep.subr.mxu0 %v462
        %606 = vmatpush1.msra.mxu0 %v461
        %607 = vmatprep.subr.mxu0 %v466
        %608 = vmatpush1.msra.mxu0 %v465
        %609 = vmatprep.subr.mxu0 %v470
        %610 = vmatpush1.msra.mxu0 %v469
        %611 = vmatprep.subr.mxu0 %v474
        %612 = vmatpush1.msra.mxu0 %v473
        %613 = vmatprep.subr.mxu0 %v478
        %614 = vmatpush1.msra.mxu0 %v477
        %615 = vmatprep.subr.mxu0 %v482
        %616 = vmatpush1.msra.mxu0 %v481
        %617 = vmatprep.subr.mxu0 %v486
        %618 = vmatpush1.msra.mxu0 %v485
        %619 = vmatprep.subr.mxu0 %v490
        %620 = vmatpush1.msra.mxu0 %v489
        %621 = vmatprep.subr.mxu0 %v494
        %622 = vmatpush1.msra.mxu0 %v493
        %623 = vmatprep.subr.mxu0 %v498
        %624 = vmatpush1.msra.mxu0 %v497
        %625 = vmatprep.subr.mxu0 %v502
        %626 = vmatpush1.msra.mxu0 %v501
        %627 = vmatprep.subr.mxu0 %v506
        %628 = vmatpush1.msra.mxu0 %v505
        %629 = vmatprep.subr.mxu0 %v510
        %630 = vmatpush1.msra.mxu0 %v509
        %631 = vmatprep.subr.mxu0 %v514
        %632 = vmatpush1.msra.mxu0 %v513
        %633 = vmatprep.subr.mxu0 %v518
        %634 = vmatpush1.msra.mxu0 %v517
        %635 = vmatprep.subr.mxu0 %v522
        %636 = vmatpush1.msra.mxu0 %v521
        %637 = vmatprep.subr.mxu0 %v526
        %638 = vmatpush1.msra.mxu0 %v525
        %639 = vmatprep.subr.mxu0 %v530
        %640 = vmatpush1.msra.mxu0 %v529
        %641 = vmatprep.subr.mxu0 %v534
        %642 = vmatpush1.msra.mxu0 %v533
        %643 = vmatprep.subr.mxu0 %v538
        %644 = vmatpush1.msra.mxu0 %v537
        %645 = vmatprep.subr.mxu0 %v542
        %646 = vmatpush1.msra.mxu0 %v541
        %647 = vmatprep.mubr.f32.mxu0 %v402
        %648 = vmatmul.mubr.f32.gmra.mrb[0].mxu0 %v401
        %v649 = vpop.f32.mrb[0].mxu0
        %v650 = vadd.f32 %v570, %v649
        %v651 = vpop.f32.mrb[0].mxu0
        %v652 = vadd.f32 %v574, %v651
        %653 = vmatprep.mubr.f32.mxu0 %v404
        %654 = vmatmul.mubr.f32.gmra.mrb[0].mxu0 %v403
        %v655 = vpop.f32.mrb[0].mxu0
        %v656 = vadd.f32 %v570, %v655
        %v657 = vpop.f32.mrb[0].mxu0
        %v658 = vadd.f32 %v574, %v657
        %659 = vmatprep.mubr.f32.mxu0 %v406
        %660 = vmatmul.mubr.f32.gmra.mrb[0].mxu0 %v405
        %v661 = vpop.f32.mrb[0].mxu0
        %v662 = vadd.f32 %v570, %v661
        %v663 = vpop.f32.mrb[0].mxu0
        %v664 = vadd.f32 %v574, %v663
        %665 = vmatprep.mubr.f32.mxu0 %v408
        %666 = vmatmul.mubr.f32.gmra.mrb[0].mxu0 %v407
        %v667 = vpop.f32.mrb[0].mxu0
        %v668 = vadd.f32 %v570, %v667
        %v669 = vpop.f32.mrb[0].mxu0
        %v670 = vadd.f32 %v574, %v669
        %671 = vmatprep.mubr.f32.mxu0 %v410
        %672 = vmatmul.mubr.f32.gmra.mrb[0].mxu0 %v409
        %v673 = vpop.f32.mrb[0].mxu0
        %v674 = vadd.f32 %v570, %v673
        %v675 = vpop.f32.mrb[0].mxu0
        %v676 = vadd.f32 %v574, %v675
        %677 = vmatprep.mubr.f32.mxu0 %v412
        %678 = vmatmul.mubr.f32.gmra.mrb[0].mxu0 %v411
        %v679 = vpop.f32.mrb[0].mxu0
        %v680 = vadd.f32 %v570, %v679
        %v681 = vpop.f32.mrb[0].mxu0
        %v682 = vadd.f32 %v574, %v681
        %683 = vmatprep.mubr.f32.mxu0 %v414
        %684 = vmatmul.mubr.f32.gmra.mrb[0].mxu0 %v413
        %v685 = vpop.f32.mrb[0].mxu0
        %v686 = vadd.f32 %v570, %v685
        %v687 = vpop.f32.mrb[0].mxu0
        %v688 = vadd.f32 %v574, %v687
        %689 = vmatprep.mubr.f32.mxu0 %v416
        %690 = vmatmul.mubr.f32.gmra.mrb[0].mxu0 %v415
        %v691 = vpop.f32.mrb[0].mxu0
        %v692 = vadd.f32 %v570, %v691
        %v693 = vpop.f32.mrb[0].mxu0
        %v694 = vadd.f32 %v574, %v693
        %695 = vdwg.mxu0
        %696 = vmatprep.subr.mxu0 %v420
        %697 = vmatpush1.msra.mxu0 %v419
        %698 = vmatprep.subr.mxu0 %v424
        %699 = vmatpush1.msra.mxu0 %v423
        %700 = vmatprep.subr.mxu0 %v428
        %701 = vmatpush1.msra.mxu0 %v427
        %702 = vmatprep.subr.mxu0 %v432
        %703 = vmatpush1.msra.mxu0 %v431
        %704 = vmatprep.subr.mxu0 %v436
        %705 = vmatpush1.msra.mxu0 %v435
        %706 = vmatprep.subr.mxu0 %v440
        %707 = vmatpush1.msra.mxu0 %v439
        %708 = vmatprep.subr.mxu0 %v444
        %709 = vmatpush1.msra.mxu0 %v443
        %710 = vmatprep.subr.mxu0 %v448
        %711 = vmatpush1.msra.mxu0 %v447
        %712 = vmatprep.subr.mxu0 %v452
        %713 = vmatpush1.msra.mxu0 %v451
        %714 = vmatprep.subr.mxu0 %v456
        %715 = vmatpush1.msra.mxu0 %v455
        %716 = vmatprep.subr.mxu0 %v460
        %717 = vmatpush1.msra.mxu0 %v459
        %718 = vmatprep.subr.mxu0 %v464
        %719 = vmatpush1.msra.mxu0 %v463
        %720 = vmatprep.subr.mxu0 %v468
        %721 = vmatpush1.msra.mxu0 %v467
        %722 = vmatprep.subr.mxu0 %v472
        %723 = vmatpush1.msra.mxu0 %v471
        %724 = vmatprep.subr.mxu0 %v476
        %725 = vmatpush1.msra.mxu0 %v475
        %726 = vmatprep.subr.mxu0 %v480
        %727 = vmatpush1.msra.mxu0 %v479
        %728 = vmatprep.subr.mxu0 %v484
        %729 = vmatpush1.msra.mxu0 %v483
        %730 = vmatprep.subr.mxu0 %v488
        %731 = vmatpush1.msra.mxu0 %v487
        %732 = vmatprep.subr.mxu0 %v492
        %733 = vmatpush1.msra.mxu0 %v491
        %734 = vmatprep.subr.mxu0 %v496
        %735 = vmatpush1.msra.mxu0 %v495
        %736 = vmatprep.subr.mxu0 %v500
        %737 = vmatpush1.msra.mxu0 %v499
        %738 = vmatprep.subr.mxu0 %v504
        %739 = vmatpush1.msra.mxu0 %v503
        %740 = vmatprep.subr.mxu0 %v508
        %741 = vmatpush1.msra.mxu0 %v507
        %742 = vmatprep.subr.mxu0 %v512
        %743 = vmatpush1.msra.mxu0 %v511
        %744 = vmatprep.subr.mxu0 %v516
        %745 = vmatpush1.msra.mxu0 %v515
        %746 = vmatprep.subr.mxu0 %v520
        %747 = vmatpush1.msra.mxu0 %v519
        %748 = vmatprep.subr.mxu0 %v524
        %749 = vmatpush1.msra.mxu0 %v523
        %750 = vmatprep.subr.mxu0 %v528
        %751 = vmatpush1.msra.mxu0 %v527
        %752 = vmatprep.subr.mxu0 %v532
        %753 = vmatpush1.msra.mxu0 %v531
        %754 = vmatprep.subr.mxu0 %v536
        %755 = vmatpush1.msra.mxu0 %v535
        %756 = vmatprep.subr.mxu0 %v540
        %757 = vmatpush1.msra.mxu0 %v539
        %758 = vmatprep.subr.mxu0 %v544
        %759 = vmatpush1.msra.mxu0 %v543
        %760 = vmatprep.mubr.f32.mxu0 %v402
        %761 = vmatmul.mubr.f32.gmra.mrb[0].mxu0 %v401
        %v762 = vpop.f32.mrb[0].mxu0
        %v763 = vadd.f32 %v578, %v762
        %v764 = vpop.f32.mrb[0].mxu0
        %v765 = vadd.f32 %v582, %v764
        %766 = vmatprep.mubr.f32.mxu0 %v404
        %767 = vmatmul.mubr.f32.gmra.mrb[0].mxu0 %v403
        %v768 = vpop.f32.mrb[0].mxu0
        %v769 = vadd.f32 %v578, %v768
        %v770 = vpop.f32.mrb[0].mxu0
        %v771 = vadd.f32 %v582, %v770
        %772 = vmatprep.mubr.f32.mxu0 %v406
        %773 = vmatmul.mubr.f32.gmra.mrb[0].mxu0 %v405
        %v774 = vpop.f32.mrb[0].mxu0
        %v775 = vadd.f32 %v578, %v774
        %v776 = vpop.f32.mrb[0].mxu0
        %v777 = vadd.f32 %v582, %v776
        %778 = vmatprep.mubr.f32.mxu0 %v408
        %779 = vmatmul.mubr.f32.gmra.mrb[0].mxu0 %v407
        %v780 = vpop.f32.mrb[0].mxu0
        %v781 = vadd.f32 %v578, %v780
        %v782 = vpop.f32.mrb[0].mxu0
        %v783 = vadd.f32 %v582, %v782
        %784 = vmatprep.mubr.f32.mxu0 %v410
        %785 = vmatmul.mubr.f32.gmra.mrb[0].mxu0 %v409
        %v786 = vpop.f32.mrb[0].mxu0
        %v787 = vadd.f32 %v578, %v786
        %v788 = vpop.f32.mrb[0].mxu0
        %v789 = vadd.f32 %v582, %v788
        %790 = vmatprep.mubr.f32.mxu0 %v412
        %791 = vmatmul.mubr.f32.gmra.mrb[0].mxu0 %v411
        %v792 = vpop.f32.mrb[0].mxu0
        %v793 = vadd.f32 %v578, %v792
        %v794 = vpop.f32.mrb[0].mxu0
        %v795 = vadd.f32 %v582, %v794
        %796 = vmatprep.mubr.f32.mxu0 %v414
        %797 = vmatmul.mubr.f32.gmra.mrb[0].mxu0 %v413
        %v798 = vpop.f32.mrb[0].mxu0
        %v799 = vadd.f32 %v578, %v798
        %v800 = vpop.f32.mrb[0].mxu0
        %v801 = vadd.f32 %v582, %v800
        %802 = vmatprep.mubr.f32.mxu0 %v416
        %803 = vmatmul.mubr.f32.gmra.mrb[0].mxu0 %v415
        %v804 = vpop.f32.mrb[0].mxu0
        %v805 = vadd.f32 %v578, %v804
        %v806 = vpop.f32.mrb[0].mxu0
        %v807 = vadd.f32 %v582, %v806
        %808 = vdwg.mxu0
        %v809 = vlaneseq
        %v810 = vshrl.u32 %v809, 7
        %v811 = vsub.s32 1, %v810
        %v812 = vrot.slane %v545, %v811
        %v813 = vlaneseq
        %v814 = vshrl.u32 %v813, 7
        %v815 = vsub.s32 3, %v814
        %v816 = vrot.slane %v545, %v815
        %v817 = vlaneseq
        %v818 = vshrl.u32 %v817, 7
        %v819 = vsub.s32 5, %v818
        %v820 = vrot.slane %v545, %v819
        %v821 = vlaneseq
        %v822 = vshrl.u32 %v821, 7
        %v823 = vsub.s32 7, %v822
        %v824 = vrot.slane %v545, %v823
        %v829 = vlaneseq
        %v830 = vshrl.u32 %v829, 7
        %v831 = vsub.s32 1, %v830
        %v832 = vrot.slane %v812, %v831
        %v833 = vlaneseq
        %v834 = vshrl.u32 %v833, 7
        %v835 = vsub.s32 1, %v834
        %v836 = vrot.slane %v816, %v835
        %v837 = vlaneseq
        %v838 = vshrl.u32 %v837, 7
        %v839 = vsub.s32 1, %v838
        %v840 = vrot.slane %v820, %v839
        %v841 = vlaneseq
        %v842 = vshrl.u32 %v841, 7
        %v843 = vsub.s32 1, %v842
        %v844 = vrot.slane %v824, %v843
        %vm845 = vcmp.gt.f32.partialorder %v650, %v832
        %vm846 = vcmp.gt.f32.partialorder %v652, %v836
        %vm847 = vcmp.gt.f32.partialorder %v763, %v840
        %vm848 = vcmp.gt.f32.partialorder %v765, %v844
        %vm849 = vcmp.gt.f32.partialorder %v656, %v832
        %vm850 = vcmp.gt.f32.partialorder %v658, %v836
        %vm851 = vcmp.gt.f32.partialorder %v769, %v840
        %vm852 = vcmp.gt.f32.partialorder %v771, %v844
        %vm853 = vcmp.gt.f32.partialorder %v662, %v832
        %vm854 = vcmp.gt.f32.partialorder %v664, %v836
        %vm855 = vcmp.gt.f32.partialorder %v775, %v840
        %vm856 = vcmp.gt.f32.partialorder %v777, %v844
        %vm857 = vcmp.gt.f32.partialorder %v668, %v832
        %vm858 = vcmp.gt.f32.partialorder %v670, %v836
        %vm859 = vcmp.gt.f32.partialorder %v781, %v840
        %vm860 = vcmp.gt.f32.partialorder %v783, %v844
        %vm861 = vcmp.gt.f32.partialorder %v674, %v832
        %vm862 = vcmp.gt.f32.partialorder %v676, %v836
        %vm863 = vcmp.gt.f32.partialorder %v787, %v840
        %vm864 = vcmp.gt.f32.partialorder %v789, %v844
        %vm865 = vcmp.gt.f32.partialorder %v680, %v832
        %vm866 = vcmp.gt.f32.partialorder %v682, %v836
        %vm867 = vcmp.gt.f32.partialorder %v793, %v840
        %vm868 = vcmp.gt.f32.partialorder %v795, %v844
        %vm869 = vcmp.gt.f32.partialorder %v686, %v832
        %vm870 = vcmp.gt.f32.partialorder %v688, %v836
        %vm871 = vcmp.gt.f32.partialorder %v799, %v840
        %vm872 = vcmp.gt.f32.partialorder %v801, %v844
        %vm873 = vcmp.gt.f32.partialorder %v692, %v832
        %vm874 = vcmp.gt.f32.partialorder %v694, %v836
        %vm875 = vcmp.gt.f32.partialorder %v805, %v840
        %vm876 = vcmp.gt.f32.partialorder %v807, %v844
        %v877 = vmax.f32 %v650, 0.0
        %v878 = vmax.f32 %v652, 0.0
        %v879 = vmax.f32 %v763, 0.0
        %v880 = vmax.f32 %v765, 0.0
        %v881 = vmax.f32 %v656, 0.0
        %v882 = vmax.f32 %v658, 0.0
        %v883 = vmax.f32 %v769, 0.0
        %v884 = vmax.f32 %v771, 0.0
        %v885 = vmax.f32 %v662, 0.0
        %v886 = vmax.f32 %v664, 0.0
        %v887 = vmax.f32 %v775, 0.0
        %v888 = vmax.f32 %v777, 0.0
        %v889 = vmax.f32 %v668, 0.0
        %v890 = vmax.f32 %v670, 0.0
        %v891 = vmax.f32 %v781, 0.0
        %v892 = vmax.f32 %v783, 0.0
        %v893 = vmax.f32 %v674, 0.0
        %v894 = vmax.f32 %v676, 0.0
        %v895 = vmax.f32 %v787, 0.0
        %v896 = vmax.f32 %v789, 0.0
        %v897 = vmax.f32 %v680, 0.0
        %v898 = vmax.f32 %v682, 0.0
        %v899 = vmax.f32 %v793, 0.0
        %v900 = vmax.f32 %v795, 0.0
        %v901 = vmax.f32 %v686, 0.0
        %v902 = vmax.f32 %v688, 0.0
        %v903 = vmax.f32 %v799, 0.0
        %v904 = vmax.f32 %v801, 0.0
        %v905 = vmax.f32 %v692, 0.0
        %v906 = vmax.f32 %v694, 0.0
        %v907 = vmax.f32 %v805, 0.0
        %v908 = vmax.f32 %v807, 0.0
        %v909 = vsel %vm845, %v877, 0.0
        %v910 = vsel %vm846, %v878, 0.0
        %v911 = vsel %vm847, %v879, 0.0
        %v912 = vsel %vm848, %v880, 0.0
        %v913 = vsel %vm849, %v881, 0.0
        %v914 = vsel %vm850, %v882, 0.0
        %v915 = vsel %vm851, %v883, 0.0
        %v916 = vsel %vm852, %v884, 0.0
        %v917 = vsel %vm853, %v885, 0.0
        %v918 = vsel %vm854, %v886, 0.0
        %v919 = vsel %vm855, %v887, 0.0
        %v920 = vsel %vm856, %v888, 0.0
        %v921 = vsel %vm857, %v889, 0.0
        %v922 = vsel %vm858, %v890, 0.0
        %v923 = vsel %vm859, %v891, 0.0
        %v924 = vsel %vm860, %v892, 0.0
        %v925 = vsel %vm861, %v893, 0.0
        %v926 = vsel %vm862, %v894, 0.0
        %v927 = vsel %vm863, %v895, 0.0
        %v928 = vsel %vm864, %v896, 0.0
        %v929 = vsel %vm865, %v897, 0.0
        %v930 = vsel %vm866, %v898, 0.0
        %v931 = vsel %vm867, %v899, 0.0
        %v932 = vsel %vm868, %v900, 0.0
        %v933 = vsel %vm869, %v901, 0.0
        %v934 = vsel %vm870, %v902, 0.0
        %v935 = vsel %vm871, %v903, 0.0
        %v936 = vsel %vm872, %v904, 0.0
        %v937 = vsel %vm873, %v905, 0.0
        %v938 = vsel %vm874, %v906, 0.0
        %v939 = vsel %vm875, %v907, 0.0
        %v940 = vsel %vm876, %v908, 0.0
        %v941 = vld [vmem:[%s316] sm:$0xff]
        %v942 = vld [vmem:[%s316 + $0x8] sm:$0xff]
        %v943 = vld [vmem:[%s316 + $0x10] sm:$0xff]
        %v944 = vld [vmem:[%s316 + $0x18] sm:$0xff]
        %v945 = vld [vmem:[%s316 + $0x20] sm:$0xff]
        %v946 = vld [vmem:[%s316 + $0x28] sm:$0xff]
        %v947 = vld [vmem:[%s316 + $0x30] sm:$0xff]
        %v948 = vld [vmem:[%s316 + $0x38] sm:$0xff]
        %v949 = vld [vmem:[%s316 + $0x40] sm:$0xff]
        %v950 = vld [vmem:[%s316 + $0x48] sm:$0xff]
        %v951 = vld [vmem:[%s316 + $0x50] sm:$0xff]
        %v952 = vld [vmem:[%s316 + $0x58] sm:$0xff]
        %v953 = vld [vmem:[%s316 + $0x60] sm:$0xff]
        %v954 = vld [vmem:[%s316 + $0x68] sm:$0xff]
        %v955 = vld [vmem:[%s316 + $0x70] sm:$0xff]
        %v956 = vld [vmem:[%s316 + $0x78] sm:$0xff]
        %v957 = vld [vmem:[%s316 + $0x80] sm:$0xff]
        %v958 = vld [vmem:[%s316 + $0x88] sm:$0xff]
        %v959 = vld [vmem:[%s316 + $0x90] sm:$0xff]
        %v960 = vld [vmem:[%s316 + $0x98] sm:$0xff]
        %v961 = vld [vmem:[%s316 + $0xa0] sm:$0xff]
        %v962 = vld [vmem:[%s316 + $0xa8] sm:$0xff]
        %v963 = vld [vmem:[%s316 + $0xb0] sm:$0xff]
        %v964 = vld [vmem:[%s316 + $0xb8] sm:$0xff]
        %v965 = vld [vmem:[%s316 + $0xc0] sm:$0xff]
        %v966 = vld [vmem:[%s316 + $0xc8] sm:$0xff]
        %v967 = vld [vmem:[%s316 + $0xd0] sm:$0xff]
        %v968 = vld [vmem:[%s316 + $0xd8] sm:$0xff]
        %v969 = vld [vmem:[%s316 + $0xe0] sm:$0xff]
        %v970 = vld [vmem:[%s316 + $0xe8] sm:$0xff]
        %v971 = vld [vmem:[%s316 + $0xf0] sm:$0xff]
        %v972 = vld [vmem:[%s316 + $0xf8] sm:$0xff]
        %v973 = vld [vmem:[%s316 + $0x100] sm:$0xff]
        %v974 = vld [vmem:[%s316 + $0x108] sm:$0xff]
        %v975 = vld [vmem:[%s316 + $0x110] sm:$0xff]
        %v976 = vld [vmem:[%s316 + $0x118] sm:$0xff]
        %v977 = vld [vmem:[%s316 + $0x120] sm:$0xff]
        %v978 = vld [vmem:[%s316 + $0x128] sm:$0xff]
        %v979 = vld [vmem:[%s316 + $0x130] sm:$0xff]
        %v980 = vld [vmem:[%s316 + $0x138] sm:$0xff]
        %v981 = vld [vmem:[%s316 + $0x140] sm:$0xff]
        %v982 = vld [vmem:[%s316 + $0x148] sm:$0xff]
        %v983 = vld [vmem:[%s316 + $0x150] sm:$0xff]
        %v984 = vld [vmem:[%s316 + $0x158] sm:$0xff]
        %v985 = vld [vmem:[%s316 + $0x160] sm:$0xff]
        %v986 = vld [vmem:[%s316 + $0x168] sm:$0xff]
        %v987 = vld [vmem:[%s316 + $0x170] sm:$0xff]
        %v988 = vld [vmem:[%s316 + $0x178] sm:$0xff]
        %v989 = vld [vmem:[%s316 + $0x180] sm:$0xff]
        %v990 = vld [vmem:[%s316 + $0x188] sm:$0xff]
        %v991 = vld [vmem:[%s316 + $0x190] sm:$0xff]
        %v992 = vld [vmem:[%s316 + $0x198] sm:$0xff]
        %v993 = vld [vmem:[%s316 + $0x1a0] sm:$0xff]
        %v994 = vld [vmem:[%s316 + $0x1a8] sm:$0xff]
        %v995 = vld [vmem:[%s316 + $0x1b0] sm:$0xff]
        %v996 = vld [vmem:[%s316 + $0x1b8] sm:$0xff]
        %v997 = vld [vmem:[%s316 + $0x1c0] sm:$0xff]
        %v998 = vld [vmem:[%s316 + $0x1c8] sm:$0xff]
        %v999 = vld [vmem:[%s316 + $0x1d0] sm:$0xff]
        %v1000 = vld [vmem:[%s316 + $0x1d8] sm:$0xff]
        %v1001 = vld [vmem:[%s316 + $0x1e0] sm:$0xff]
        %v1002 = vld [vmem:[%s316 + $0x1e8] sm:$0xff]
        %v1003 = vld [vmem:[%s316 + $0x1f0] sm:$0xff]
        %v1004 = vld [vmem:[%s316 + $0x1f8] sm:$0xff]
        %v1005 = vld [vmem:[%s316 + $0x200] sm:$0xff]
        %v1006 = vld [vmem:[%s316 + $0x208] sm:$0xff]
        %v1007 = vld [vmem:[%s316 + $0x210] sm:$0xff]
        %v1008 = vld [vmem:[%s316 + $0x218] sm:$0xff]
        %v1009 = vld [vmem:[%s316 + $0x220] sm:$0xff]
        %v1010 = vld [vmem:[%s316 + $0x228] sm:$0xff]
        %v1011 = vld [vmem:[%s316 + $0x230] sm:$0xff]
        %v1012 = vld [vmem:[%s316 + $0x238] sm:$0xff]
        %v1013 = vld [vmem:[%s316 + $0x240] sm:$0xff]
        %v1014 = vld [vmem:[%s316 + $0x248] sm:$0xff]
        %v1015 = vld [vmem:[%s316 + $0x250] sm:$0xff]
        %v1016 = vld [vmem:[%s316 + $0x258] sm:$0xff]
        %v1017 = vld [vmem:[%s316 + $0x260] sm:$0xff]
        %v1018 = vld [vmem:[%s316 + $0x268] sm:$0xff]
        %v1019 = vld [vmem:[%s316 + $0x270] sm:$0xff]
        %v1020 = vld [vmem:[%s316 + $0x278] sm:$0xff]
        %v1021 = vld [vmem:[%s316 + $0x280] sm:$0xff]
        %v1022 = vld [vmem:[%s316 + $0x288] sm:$0xff]
        %v1023 = vld [vmem:[%s316 + $0x290] sm:$0xff]
        %v1024 = vld [vmem:[%s316 + $0x298] sm:$0xff]
        %v1025 = vld [vmem:[%s316 + $0x2a0] sm:$0xff]
        %v1026 = vld [vmem:[%s316 + $0x2a8] sm:$0xff]
        %v1027 = vld [vmem:[%s316 + $0x2b0] sm:$0xff]
        %v1028 = vld [vmem:[%s316 + $0x2b8] sm:$0xff]
        %v1029 = vld [vmem:[%s316 + $0x2c0] sm:$0xff]
        %v1030 = vld [vmem:[%s316 + $0x2c8] sm:$0xff]
        %v1031 = vld [vmem:[%s316 + $0x2d0] sm:$0xff]
        %v1032 = vld [vmem:[%s316 + $0x2d8] sm:$0xff]
        %v1033 = vld [vmem:[%s316 + $0x2e0] sm:$0xff]
        %v1034 = vld [vmem:[%s316 + $0x2e8] sm:$0xff]
        %v1035 = vld [vmem:[%s316 + $0x2f0] sm:$0xff]
        %v1036 = vld [vmem:[%s316 + $0x2f8] sm:$0xff]
        %v1037 = vld [vmem:[%s316 + $0x300] sm:$0xff]
        %v1038 = vld [vmem:[%s316 + $0x308] sm:$0xff]
        %v1039 = vld [vmem:[%s316 + $0x310] sm:$0xff]
        %v1040 = vld [vmem:[%s316 + $0x318] sm:$0xff]
        %v1041 = vld [vmem:[%s316 + $0x320] sm:$0xff]
        %v1042 = vld [vmem:[%s316 + $0x328] sm:$0xff]
        %v1043 = vld [vmem:[%s316 + $0x330] sm:$0xff]
        %v1044 = vld [vmem:[%s316 + $0x338] sm:$0xff]
        %v1045 = vld [vmem:[%s316 + $0x340] sm:$0xff]
        %v1046 = vld [vmem:[%s316 + $0x348] sm:$0xff]
        %v1047 = vld [vmem:[%s316 + $0x350] sm:$0xff]
        %v1048 = vld [vmem:[%s316 + $0x358] sm:$0xff]
        %v1049 = vld [vmem:[%s316 + $0x360] sm:$0xff]
        %v1050 = vld [vmem:[%s316 + $0x368] sm:$0xff]
        %v1051 = vld [vmem:[%s316 + $0x370] sm:$0xff]
        %v1052 = vld [vmem:[%s316 + $0x378] sm:$0xff]
        %v1053 = vld [vmem:[%s316 + $0x380] sm:$0xff]
        %v1054 = vld [vmem:[%s316 + $0x388] sm:$0xff]
        %v1055 = vld [vmem:[%s316 + $0x390] sm:$0xff]
        %v1056 = vld [vmem:[%s316 + $0x398] sm:$0xff]
        %v1057 = vld [vmem:[%s316 + $0x3a0] sm:$0xff]
        %v1058 = vld [vmem:[%s316 + $0x3a8] sm:$0xff]
        %v1059 = vld [vmem:[%s316 + $0x3b0] sm:$0xff]
        %v1060 = vld [vmem:[%s316 + $0x3b8] sm:$0xff]
        %v1061 = vld [vmem:[%s316 + $0x3c0] sm:$0xff]
        %v1062 = vld [vmem:[%s316 + $0x3c8] sm:$0xff]
        %v1063 = vld [vmem:[%s316 + $0x3d0] sm:$0xff]
        %v1064 = vld [vmem:[%s316 + $0x3d8] sm:$0xff]
        %v1065 = vld [vmem:[%s316 + $0x3e0] sm:$0xff]
        %v1066 = vld [vmem:[%s316 + $0x3e8] sm:$0xff]
        %v1067 = vld [vmem:[%s316 + $0x3f0] sm:$0xff]
        %v1068 = vld [vmem:[%s316 + $0x3f8] sm:$0xff]
        %1069 = vmatprep.subr.mxu0 %v942
        %1070 = vmatpush1.msra.mxu0 %v941
        %1071 = vmatprep.subr.mxu0 %v944
        %1072 = vmatpush1.msra.mxu0 %v943
        %1073 = vmatprep.subr.mxu0 %v946
        %1074 = vmatpush1.msra.mxu0 %v945
        %1075 = vmatprep.subr.mxu0 %v948
        %1076 = vmatpush1.msra.mxu0 %v947
        %1077 = vmatprep.subr.mxu0 %v950
        %1078 = vmatpush1.msra.mxu0 %v949
        %1079 = vmatprep.subr.mxu0 %v952
        %1080 = vmatpush1.msra.mxu0 %v951
        %1081 = vmatprep.subr.mxu0 %v954
        %1082 = vmatpush1.msra.mxu0 %v953
        %1083 = vmatprep.subr.mxu0 %v956
        %1084 = vmatpush1.msra.mxu0 %v955
        %1085 = vmatprep.subr.mxu0 %v958
        %1086 = vmatpush1.msra.mxu0 %v957
        %1087 = vmatprep.subr.mxu0 %v960
        %1088 = vmatpush1.msra.mxu0 %v959
        %1089 = vmatprep.subr.mxu0 %v962
        %1090 = vmatpush1.msra.mxu0 %v961
        %1091 = vmatprep.subr.mxu0 %v964
        %1092 = vmatpush1.msra.mxu0 %v963
        %1093 = vmatprep.subr.mxu0 %v966
        %1094 = vmatpush1.msra.mxu0 %v965
        %1095 = vmatprep.subr.mxu0 %v968
        %1096 = vmatpush1.msra.mxu0 %v967
        %1097 = vmatprep.subr.mxu0 %v970
        %1098 = vmatpush1.msra.mxu0 %v969
        %1099 = vmatprep.subr.mxu0 %v972
        %1100 = vmatpush1.msra.mxu0 %v971
        %1101 = vmatprep.subr.mxu0 %v974
        %1102 = vmatpush1.msra.mxu0 %v973
        %1103 = vmatprep.subr.mxu0 %v976
        %1104 = vmatpush1.msra.mxu0 %v975
        %1105 = vmatprep.subr.mxu0 %v978
        %1106 = vmatpush1.msra.mxu0 %v977
        %1107 = vmatprep.subr.mxu0 %v980
        %1108 = vmatpush1.msra.mxu0 %v979
        %1109 = vmatprep.subr.mxu0 %v982
        %1110 = vmatpush1.msra.mxu0 %v981
        %1111 = vmatprep.subr.mxu0 %v984
        %1112 = vmatpush1.msra.mxu0 %v983
        %1113 = vmatprep.subr.mxu0 %v986
        %1114 = vmatpush1.msra.mxu0 %v985
        %1115 = vmatprep.subr.mxu0 %v988
        %1116 = vmatpush1.msra.mxu0 %v987
        %1117 = vmatprep.subr.mxu0 %v990
        %1118 = vmatpush1.msra.mxu0 %v989
        %1119 = vmatprep.subr.mxu0 %v992
        %1120 = vmatpush1.msra.mxu0 %v991
        %1121 = vmatprep.subr.mxu0 %v994
        %1122 = vmatpush1.msra.mxu0 %v993
        %1123 = vmatprep.subr.mxu0 %v996
        %1124 = vmatpush1.msra.mxu0 %v995
        %1125 = vmatprep.subr.mxu0 %v998
        %1126 = vmatpush1.msra.mxu0 %v997
        %1127 = vmatprep.subr.mxu0 %v1000
        %1128 = vmatpush1.msra.mxu0 %v999
        %1129 = vmatprep.subr.mxu0 %v1002
        %1130 = vmatpush1.msra.mxu0 %v1001
        %1131 = vmatprep.subr.mxu0 %v1004
        %1132 = vmatpush1.msra.mxu0 %v1003
        %1133 = vmatprep.mubr.f32.mxu0 %v910
        %1134 = vmatmul.mubr.f32.gmra.mrb[0].mxu0 %v909
        %v1135 = vpop.f32.mrb[0].mxu0
        %v1136 = vadd.f32 0.0, %v1135
        %v1137 = vpop.f32.mrb[0].mxu0
        %v1138 = vadd.f32 0.0, %v1137
        %1139 = vmatprep.mubr.f32.mxu0 %v914
        %1140 = vmatmul.mubr.f32.gmra.mrb[0].mxu0 %v913
        %v1141 = vpop.f32.mrb[0].mxu0
        %v1142 = vadd.f32 0.0, %v1141
        %v1143 = vpop.f32.mrb[0].mxu0
        %v1144 = vadd.f32 0.0, %v1143
        %1145 = vmatprep.mubr.f32.mxu0 %v918
        %1146 = vmatmul.mubr.f32.gmra.mrb[0].mxu0 %v917
        %v1147 = vpop.f32.mrb[0].mxu0
        %v1148 = vadd.f32 0.0, %v1147
        %v1149 = vpop.f32.mrb[0].mxu0
        %v1150 = vadd.f32 0.0, %v1149
        %1151 = vmatprep.mubr.f32.mxu0 %v922
        %1152 = vmatmul.mubr.f32.gmra.mrb[0].mxu0 %v921
        %v1153 = vpop.f32.mrb[0].mxu0
        %v1154 = vadd.f32 0.0, %v1153
        %v1155 = vpop.f32.mrb[0].mxu0
        %v1156 = vadd.f32 0.0, %v1155
        %1157 = vmatprep.mubr.f32.mxu0 %v926
        %1158 = vmatmul.mubr.f32.gmra.mrb[0].mxu0 %v925
        %v1159 = vpop.f32.mrb[0].mxu0
        %v1160 = vadd.f32 0.0, %v1159
        %v1161 = vpop.f32.mrb[0].mxu0
        %v1162 = vadd.f32 0.0, %v1161
        %1163 = vmatprep.mubr.f32.mxu0 %v930
        %1164 = vmatmul.mubr.f32.gmra.mrb[0].mxu0 %v929
        %v1165 = vpop.f32.mrb[0].mxu0
        %v1166 = vadd.f32 0.0, %v1165
        %v1167 = vpop.f32.mrb[0].mxu0
        %v1168 = vadd.f32 0.0, %v1167
        %1169 = vmatprep.mubr.f32.mxu0 %v934
        %1170 = vmatmul.mubr.f32.gmra.mrb[0].mxu0 %v933
        %v1171 = vpop.f32.mrb[0].mxu0
        %v1172 = vadd.f32 0.0, %v1171
        %v1173 = vpop.f32.mrb[0].mxu0
        %v1174 = vadd.f32 0.0, %v1173
        %1175 = vmatprep.mubr.f32.mxu0 %v938
        %1176 = vmatmul.mubr.f32.gmra.mrb[0].mxu0 %v937
        %v1177 = vpop.f32.mrb[0].mxu0
        %v1178 = vadd.f32 0.0, %v1177
        %v1179 = vpop.f32.mrb[0].mxu0
        %v1180 = vadd.f32 0.0, %v1179
        %1181 = vdwg.mxu0
        %1182 = vmatprep.subr.mxu0 %v1006
        %1183 = vmatpush1.msra.mxu0 %v1005
        %1184 = vmatprep.subr.mxu0 %v1008
        %1185 = vmatpush1.msra.mxu0 %v1007
        %1186 = vmatprep.subr.mxu0 %v1010
        %1187 = vmatpush1.msra.mxu0 %v1009
        %1188 = vmatprep.subr.mxu0 %v1012
        %1189 = vmatpush1.msra.mxu0 %v1011
        %1190 = vmatprep.subr.mxu0 %v1014
        %1191 = vmatpush1.msra.mxu0 %v1013
        %1192 = vmatprep.subr.mxu0 %v1016
        %1193 = vmatpush1.msra.mxu0 %v1015
        %1194 = vmatprep.subr.mxu0 %v1018
        %1195 = vmatpush1.msra.mxu0 %v1017
        %1196 = vmatprep.subr.mxu0 %v1020
        %1197 = vmatpush1.msra.mxu0 %v1019
        %1198 = vmatprep.subr.mxu0 %v1022
        %1199 = vmatpush1.msra.mxu0 %v1021
        %1200 = vmatprep.subr.mxu0 %v1024
        %1201 = vmatpush1.msra.mxu0 %v1023
        %1202 = vmatprep.subr.mxu0 %v1026
        %1203 = vmatpush1.msra.mxu0 %v1025
        %1204 = vmatprep.subr.mxu0 %v1028
        %1205 = vmatpush1.msra.mxu0 %v1027
        %1206 = vmatprep.subr.mxu0 %v1030
        %1207 = vmatpush1.msra.mxu0 %v1029
        %1208 = vmatprep.subr.mxu0 %v1032
        %1209 = vmatpush1.msra.mxu0 %v1031
        %1210 = vmatprep.subr.mxu0 %v1034
        %1211 = vmatpush1.msra.mxu0 %v1033
        %1212 = vmatprep.subr.mxu0 %v1036
        %1213 = vmatpush1.msra.mxu0 %v1035
        %1214 = vmatprep.subr.mxu0 %v1038
        %1215 = vmatpush1.msra.mxu0 %v1037
        %1216 = vmatprep.subr.mxu0 %v1040
        %1217 = vmatpush1.msra.mxu0 %v1039
        %1218 = vmatprep.subr.mxu0 %v1042
        %1219 = vmatpush1.msra.mxu0 %v1041
        %1220 = vmatprep.subr.mxu0 %v1044
        %1221 = vmatpush1.msra.mxu0 %v1043
        %1222 = vmatprep.subr.mxu0 %v1046
        %1223 = vmatpush1.msra.mxu0 %v1045
        %1224 = vmatprep.subr.mxu0 %v1048
        %1225 = vmatpush1.msra.mxu0 %v1047
        %1226 = vmatprep.subr.mxu0 %v1050
        %1227 = vmatpush1.msra.mxu0 %v1049
        %1228 = vmatprep.subr.mxu0 %v1052
        %1229 = vmatpush1.msra.mxu0 %v1051
        %1230 = vmatprep.subr.mxu0 %v1054
        %1231 = vmatpush1.msra.mxu0 %v1053
        %1232 = vmatprep.subr.mxu0 %v1056
        %1233 = vmatpush1.msra.mxu0 %v1055
        %1234 = vmatprep.subr.mxu0 %v1058
        %1235 = vmatpush1.msra.mxu0 %v1057
        %1236 = vmatprep.subr.mxu0 %v1060
        %1237 = vmatpush1.msra.mxu0 %v1059
        %1238 = vmatprep.subr.mxu0 %v1062
        %1239 = vmatpush1.msra.mxu0 %v1061
        %1240 = vmatprep.subr.mxu0 %v1064
        %1241 = vmatpush1.msra.mxu0 %v1063
        %1242 = vmatprep.subr.mxu0 %v1066
        %1243 = vmatpush1.msra.mxu0 %v1065
        %1244 = vmatprep.subr.mxu0 %v1068
        %1245 = vmatpush1.msra.mxu0 %v1067
        %1246 = vmatprep.mubr.f32.mxu0 %v912
        %1247 = vmatmul.mubr.f32.gmra.mrb[0].mxu0 %v911
        %v1248 = vpop.f32.mrb[0].mxu0
        %v1249 = vadd.f32 %v1136, %v1248
        %v1250 = vpop.f32.mrb[0].mxu0
        %v1251 = vadd.f32 %v1138, %v1250
        %1252 = vmatprep.mubr.f32.mxu0 %v916
        %1253 = vmatmul.mubr.f32.gmra.mrb[0].mxu0 %v915
        %v1254 = vpop.f32.mrb[0].mxu0
        %v1255 = vadd.f32 %v1142, %v1254
        %v1256 = vpop.f32.mrb[0].mxu0
        %v1257 = vadd.f32 %v1144, %v1256
        %1258 = vmatprep.mubr.f32.mxu0 %v920
        %1259 = vmatmul.mubr.f32.gmra.mrb[0].mxu0 %v919
        %v1260 = vpop.f32.mrb[0].mxu0
        %v1261 = vadd.f32 %v1148, %v1260
        %v1262 = vpop.f32.mrb[0].mxu0
        %v1263 = vadd.f32 %v1150, %v1262
        %1264 = vmatprep.mubr.f32.mxu0 %v924
        %1265 = vmatmul.mubr.f32.gmra.mrb[0].mxu0 %v923
        %v1266 = vpop.f32.mrb[0].mxu0
        %v1267 = vadd.f32 %v1154, %v1266
        %v1268 = vpop.f32.mrb[0].mxu0
        %v1269 = vadd.f32 %v1156, %v1268
        %1270 = vmatprep.mubr.f32.mxu0 %v928
        %1271 = vmatmul.mubr.f32.gmra.mrb[0].mxu0 %v927
        %v1272 = vpop.f32.mrb[0].mxu0
        %v1273 = vadd.f32 %v1160, %v1272
        %v1274 = vpop.f32.mrb[0].mxu0
        %v1275 = vadd.f32 %v1162, %v1274
        %1276 = vmatprep.mubr.f32.mxu0 %v932
        %1277 = vmatmul.mubr.f32.gmra.mrb[0].mxu0 %v931
        %v1278 = vpop.f32.mrb[0].mxu0
        %v1279 = vadd.f32 %v1166, %v1278
        %v1280 = vpop.f32.mrb[0].mxu0
        %v1281 = vadd.f32 %v1168, %v1280
        %1282 = vmatprep.mubr.f32.mxu0 %v936
        %1283 = vmatmul.mubr.f32.gmra.mrb[0].mxu0 %v935
        %v1284 = vpop.f32.mrb[0].mxu0
        %v1285 = vadd.f32 %v1172, %v1284
        %v1286 = vpop.f32.mrb[0].mxu0
        %v1287 = vadd.f32 %v1174, %v1286
        %1288 = vmatprep.mubr.f32.mxu0 %v940
        %1289 = vmatmul.mubr.f32.gmra.mrb[0].mxu0 %v939
        %v1290 = vpop.f32.mrb[0].mxu0
        %v1291 = vadd.f32 %v1178, %v1290
        %v1292 = vpop.f32.mrb[0].mxu0
        %v1293 = vadd.f32 %v1180, %v1292
        %1294 = vdwg.mxu0
        %v1295 = vadd.f32 %v385, %v1249
        %v1296 = vadd.f32 %v386, %v1251
        %v1297 = vadd.f32 %v387, %v1255
        %v1298 = vadd.f32 %v388, %v1257
        %v1299 = vadd.f32 %v389, %v1261
        %v1300 = vadd.f32 %v390, %v1263
        %v1301 = vadd.f32 %v391, %v1267
        %v1302 = vadd.f32 %v392, %v1269
        %v1303 = vadd.f32 %v393, %v1273
        %v1304 = vadd.f32 %v394, %v1275
        %v1305 = vadd.f32 %v395, %v1279
        %v1306 = vadd.f32 %v396, %v1281
        %v1307 = vadd.f32 %v397, %v1285
        %v1308 = vadd.f32 %v398, %v1287
        %v1309 = vadd.f32 %v399, %v1291
        %v1310 = vadd.f32 %v400, %v1293
        %1311 = vst [vmem:[#allocation10] sm:$0xff] %v1295
        %1312 = vst [vmem:[#allocation10 + $0x8] sm:$0xff] %v1296
        %1313 = vst [vmem:[#allocation10 + $0x10] sm:$0xff] %v1297
        %1314 = vst [vmem:[#allocation10 + $0x18] sm:$0xff] %v1298
        %1315 = vst [vmem:[#allocation10 + $0x20] sm:$0xff] %v1299
        %1316 = vst [vmem:[#allocation10 + $0x28] sm:$0xff] %v1300
        %1317 = vst [vmem:[#allocation10 + $0x30] sm:$0xff] %v1301
        %1318 = vst [vmem:[#allocation10 + $0x38] sm:$0xff] %v1302
        %1319 = vst [vmem:[#allocation10 + $0x40] sm:$0xff] %v1303
        %1320 = vst [vmem:[#allocation10 + $0x48] sm:$0xff] %v1304
        %1321 = vst [vmem:[#allocation10 + $0x50] sm:$0xff] %v1305
        %1322 = vst [vmem:[#allocation10 + $0x58] sm:$0xff] %v1306
        %1323 = vst [vmem:[#allocation10 + $0x60] sm:$0xff] %v1307
        %1324 = vst [vmem:[#allocation10 + $0x68] sm:$0xff] %v1308
        %1325 = vst [vmem:[#allocation10 + $0x70] sm:$0xff] %v1309
        %1326 = vst [vmem:[#allocation10 + $0x78] sm:$0xff] %v1310
        // Predicated region
        $region61: #{tpu_custom_call.1} parent=39 // pred_check
          %p1327 = pneg %p179
        $region62: #{tpu_custom_call.1} parent=39 // pred_check_branch
          %1329 = sbr.rel (%p1327) target = $region64
        $region63: #{tpu_custom_call.1} parent=39 // pred_region
          %s1330 = smul.u32 8, %s28
          %s1332 = ssub.s32 2048, 2048
          %1333 = vsyncadd [#allocation4], %s1332
          %s1334 = smul.addr %s1330, 2
          %s1335 = smul.addr %s1334, 128
          %s1336 = scalar_lea.hbm %s5, %s1335
          %s1337 = sshll.u32 [#allocation10], 4
          %s1338 = int_to_ptr.vmem [resolvable:$true] %s1337
          %1343 = dma.vmem_to_hbm [thread:$0]  %s1338, 2048, %s1336, [#allocation4], 256, 256, 16
        $region64: #{tpu_custom_call.1} parent=39 // pred_fallthru
          _
        // Predicated region
        $region65: #{tpu_custom_call.1} parent=39 // pred_check
          %p1344 = pneg %p179
        $region66: #{tpu_custom_call.1} parent=39 // pred_check_branch
          %1346 = sbr.rel (%p1344) target = $region68
        $region67: #{tpu_custom_call.1} parent=39 // pred_region
          %1347 = dma.done [#allocation4], 2048
        $region68: #{tpu_custom_call.1} parent=39 // pred_fallthru
          _
      $region40: #{tpu_custom_call.1} parent=5 // pred_fallthru
        _
      %p1348 = scmp.le.s32.totalorder 2, %s19
      // Predicated region
      $region69: #{tpu_custom_call.1} parent=5 // pred_check
        %p1349 = pneg %p1348
      $region70: #{tpu_custom_call.1} parent=5 // pred_check_branch
        %1351 = sbr.rel (%p1349) target = $region72
      $region71: #{tpu_custom_call.1} parent=5 // pred_region
        %s1352 = ssub.s32 %s19, 2
      $region72: #{tpu_custom_call.1} parent=5 // pred_fallthru
        _
    $region6: #{tpu_custom_call.1} parent=1 // loop_footer
      %s23 = sadd.s32 1, %s19
    $region7: #{tpu_custom_call.1} parent=1 // loop_footer_branch
      %18 = sbr.rel target = $region3
    $region8: #{tpu_custom_call.1} parent=1 // loop_exit
      _
    %1353 = vsyncpa [#allocation3], 1
    %s1354 = scalar_lea.sflag [#allocation3], 1
    %1355 = vsyncpa %s1354, 1
    %1356 = vsyncpa [#allocation6], 1
    %s1357 = scalar_lea.sflag [#allocation6], 1
    %1358 = vsyncpa %s1357, 1
    %1359 = vsyncpa [#allocation9], 1
    %s1360 = scalar_lea.sflag [#allocation9], 1
    %1361 = vsyncpa %s1360, 1
    %1362 = vsyncpa [#allocation4], 1
    %s1363 = scalar_lea.sflag [#allocation4], 1
    %1364 = vsyncpa %s1363, 1

</llo_original>
